<compile_context>
chip_gen: v7x
topology: tpu7x:2x2x1
jax: 0.10.0
libtpu: 0.0.40
codegen_flags: <defaults>
</compile_context>

<pallas_src>
import jax
import jax.numpy as jnp
from jax.experimental import pallas as pl
from jax.experimental.pallas import tpu as pltpu

_LANE = 128


def _round_up(x, m):
    return ((x + m - 1) // m) * m


def _critic_kernel(x_ref, w1_ref, b1_ref, w2_ref, b2_ref, w3_ref, b3_ref, out_ref):
    """Fused 3-layer MLP.

    x_ref:  [TB, obs_dim]   (native obs layout, batch on sublanes at load time)
    w*_ref: [out_feat, in_feat]      b*_ref: [out_feat, 1]
    out_ref: [1, TB]                 (batch on lanes, unmasked lane-dense store)
    """
    x = x_ref[...].astype(jnp.float32)  # [TB, obs_dim]

    # Layer 1: contract obs_dim of both operands -> [h1, TB].
    # The batch->lane transpose happens on the MXU as part of the matmul.
    h = jnp.tanh(
        jax.lax.dot_general(
            w1_ref[...], x,
            dimension_numbers=(((1,), (1,)), ((), ())),
            preferred_element_type=jnp.float32,
            precision=jax.lax.Precision.HIGHEST,
        )
        + b1_ref[...]
    )

    # Layer 2: W2 @ h + b2, tanh -> [h2, TB]
    h = jnp.tanh(
        jnp.dot(w2_ref[...], h, preferred_element_type=jnp.float32,
                precision=jax.lax.Precision.HIGHEST)
        + b2_ref[...]
    )

    # Output: W3 @ h + b3, sigmoid -> [1, TB]
    z = (
        jnp.dot(w3_ref[...], h, preferred_element_type=jnp.float32,
                precision=jax.lax.Precision.HIGHEST)
        + b3_ref[...]
    )
    # sigmoid(z) == 0.5 * (tanh(z/2) + 1): single EUP tanh, identical math.
    out_ref[...] = (0.5 * (jnp.tanh(0.5 * z) + 1.0)).astype(out_ref.dtype)


def mlp_critic_forward(obs, params, tile_b=4096):
    """obs: [B, obs_dim] -> value: [B]  (matches torch.squeeze(v_net(obs), -1))."""
    w1, b1, w2, b2, w3, b3 = params
    B, obs_dim = obs.shape
    h1 = w1.shape[1]
    h2 = w2.shape[1]

    # Batch tile: multiple of the 128-lane width, capped at tile_b rows/step.
    B_lanes = _round_up(B, _LANE)
    TB = min(tile_b, B_lanes)
    # Keep >= 2 grid steps when the batch spans more than one lane block so
    # v7x's two TensorCores both get work (harmless on v5e/v6e: still 1 core).
    if B_lanes > _LANE and TB == B_lanes:
        TB = _round_up(pl.cdiv(B_lanes, 2), _LANE)
    grid_n = pl.cdiv(B, TB)
    B_pad = grid_n * TB  # output padded so every store is a full lane-dense tile

    obs_f32 = obs.astype(jnp.float32)  # no transpose, no pad: single HBM read
    w1_t, w2_t, w3_t = w1.T, w2.T, w3.T  # [out, in] (tiny, layout glue only)
    b1_t, b2_t, b3_t = b1.T, b2.T, b3.T  # [out, 1]

    resident = lambda arr: pl.BlockSpec(arr.shape, lambda i: (0, 0))  # VMEM-resident

    cost = pl.CostEstimate(
        flops=2 * B_pad * (obs_dim * h1 + h1 * h2 + h2 * 1),
        transcendentals=B_pad * (h1 + h2 + 1),
        bytes_accessed=4
        * (B * obs_dim + B_pad
           + w1.size + b1.size + w2.size + b2.size + w3.size + b3.size),
    )

    out = pl.pallas_call(
        _critic_kernel,
        out_shape=jax.ShapeDtypeStruct((1, B_pad), jnp.float32),
        grid=(grid_n,),
        in_specs=[
            pl.BlockSpec((TB, obs_dim), lambda i: (i, 0)),  # obs streams over batch
            resident(w1_t), resident(b1_t),
            resident(w2_t), resident(b2_t),
            resident(w3_t), resident(b3_t),
        ],
        out_specs=pl.BlockSpec((1, TB), lambda i: (0, i)),
        compiler_params=pltpu.CompilerParams(dimension_semantics=("parallel",)),
        cost_estimate=cost,
    )(obs_f32, w1_t, b1_t, w2_t, b2_t, w3_t, b3_t)

    # Strip batch padding and do the torch.squeeze(..., -1).
    return out[0, :B]


def init_params(key, obs_dim, hidden_sizes):
    """Deterministic init mimicking nn.Linear's U(-1/sqrt(fan_in), 1/sqrt(fan_in)).

    Weights stored as [in_features, out_features], biases as [1, out_features];
    the wrapper transposes (tiny arrays, layout glue only).
    """
    sizes = [obs_dim] + list(hidden_sizes) + [1]
    params = []
    for j in range(len(sizes) - 1):
        fan_in, fan_out = sizes[j], sizes[j + 1]
        key, kw, kb = jax.random.split(key, 3)
        bound = 1.0 / jnp.sqrt(fan_in)
        w = jax.random.uniform(kw, (fan_in, fan_out), jnp.float32, -bound, bound)
        b = jax.random.uniform(kb, (1, fan_out), jnp.float32, -bound, bound)
        params += [w, b]
    return tuple(params)


def reference_forward(obs, params):
    """Pure-JAX reference of the PyTorch forward for a correctness check."""
    w1, b1, w2, b2, w3, b3 = params
    hi = jax.lax.Precision.HIGHEST
    h = jnp.tanh(jnp.dot(obs, w1, precision=hi) + b1)
    h = jnp.tanh(jnp.dot(h, w2, precision=hi) + b2)
    v = jax.nn.sigmoid(jnp.dot(h, w3, precision=hi) + b3)
    return jnp.squeeze(v, axis=-1)


if __name__ == "__main__":
    key = jax.random.PRNGKey(0)
    obs_dim, hidden_sizes = 16, (32, 32)

    key, k_params = jax.random.split(key)
    params = init_params(k_params, obs_dim, hidden_sizes)

    # Single-tile, ragged single-lane-block, and multi-tile ragged batches.
    for batch in (8, 200, 300):
        key, k_obs = jax.random.split(key)
        obs = jax.random.normal(k_obs, (batch, obs_dim), jnp.float32)

        v = jax.block_until_ready(mlp_critic_forward(obs, params))
        v_ref = reference_forward(obs, params)

        assert v.shape == (batch,), v.shape
        assert jnp.allclose(v, v_ref, atol=1e-5, rtol=1e-5), (batch, v, v_ref)

    print("KERNEL_OK")
</pallas_src>

<mosaic_0001>
module attributes {stable_mosaic.version = 11 : i64} {
  func.func @_critic_kernel(%arg0: i32, %arg1: memref<128x16xf32, #tpu.memory_space<vmem>>, %arg2: memref<32x16xf32, #tpu.memory_space<vmem>>, %arg3: memref<32x1xf32, #tpu.memory_space<vmem>>, %arg4: memref<32x32xf32, #tpu.memory_space<vmem>>, %arg5: memref<32x1xf32, #tpu.memory_space<vmem>>, %arg6: memref<1x32xf32, #tpu.memory_space<vmem>>, %arg7: memref<1x1xf32, #tpu.memory_space<vmem>>, %arg8: memref<1x128xf32, #tpu.memory_space<vmem>>) attributes {dimension_semantics = [#tpu.dimension_semantics<parallel>], iteration_bounds = array<i64: 1>, scalar_prefetch = 0 : i64, scratch_operands = 0 : i64, tpu.core_type = #tpu.core_type<tc>, window_params = [{transform_indices = @transform_0, window_bounds = array<i64: 128, 16>}, {pipeline_mode = #tpu.pipeline_mode<synchronous>, transform_indices = @transform_1, window_bounds = array<i64: 32, 16>}, {pipeline_mode = #tpu.pipeline_mode<synchronous>, transform_indices = @transform_2, window_bounds = array<i64: 32, 1>}, {pipeline_mode = #tpu.pipeline_mode<synchronous>, transform_indices = @transform_3, window_bounds = array<i64: 32, 32>}, {pipeline_mode = #tpu.pipeline_mode<synchronous>, transform_indices = @transform_4, window_bounds = array<i64: 32, 1>}, {pipeline_mode = #tpu.pipeline_mode<synchronous>, transform_indices = @transform_5, window_bounds = array<i64: 1, 32>}, {pipeline_mode = #tpu.pipeline_mode<synchronous>, transform_indices = @transform_6, window_bounds = array<i64: 1, 1>}, {transform_indices = @transform_7, window_bounds = array<i64: 1, 128>}]} {
    %c0 = arith.constant 0 : index
    %c0_0 = arith.constant 0 : index
    %0 = vector.load %arg1[%c0, %c0_0] : memref<128x16xf32, #tpu.memory_space<vmem>>, vector<128x16xf32>
    %c0_1 = arith.constant 0 : index
    %c0_2 = arith.constant 0 : index
    %1 = vector.load %arg2[%c0_1, %c0_2] : memref<32x16xf32, #tpu.memory_space<vmem>>, vector<32x16xf32>
    %cst = arith.constant dense<0.000000e+00> : vector<32x128xf32>
    %2 = tpu.matmul %1, %0, %cst {dimension_numbers = #tpu.dot_dimension_numbers<[1], [1], [0], [0], [0, 0, 1, 0], [], []>, precision = #tpu.contract_precision<fp32>} : vector<32x16xf32>, vector<128x16xf32>, vector<32x128xf32> -> vector<32x128xf32>
    %c0_3 = arith.constant 0 : index
    %c0_4 = arith.constant 0 : index
    %3 = vector.load %arg3[%c0_3, %c0_4] : memref<32x1xf32, #tpu.memory_space<vmem>>, vector<32x1xf32>
    %4 = vector.broadcast %3 : vector<32x1xf32> to vector<32x128xf32>
    %5 = arith.addf %2, %4 : vector<32x128xf32>
    %6 = math.tanh %5 : vector<32x128xf32>
    %c0_5 = arith.constant 0 : index
    %c0_6 = arith.constant 0 : index
    %7 = vector.load %arg4[%c0_5, %c0_6] : memref<32x32xf32, #tpu.memory_space<vmem>>, vector<32x32xf32>
    %cst_7 = arith.constant dense<0.000000e+00> : vector<32x128xf32>
    %8 = tpu.matmul %7, %6, %cst_7 {dimension_numbers = #tpu.dot_dimension_numbers<[1], [0], [0], [1], [0, 0, 1, 1], [], []>, precision = #tpu.contract_precision<fp32>} : vector<32x32xf32>, vector<32x128xf32>, vector<32x128xf32> -> vector<32x128xf32>
    %c0_8 = arith.constant 0 : index
    %c0_9 = arith.constant 0 : index
    %9 = vector.load %arg5[%c0_8, %c0_9] : memref<32x1xf32, #tpu.memory_space<vmem>>, vector<32x1xf32>
    %10 = vector.broadcast %9 : vector<32x1xf32> to vector<32x128xf32>
    %11 = arith.addf %8, %10 : vector<32x128xf32>
    %12 = math.tanh %11 : vector<32x128xf32>
    %c0_10 = arith.constant 0 : index
    %c0_11 = arith.constant 0 : index
    %13 = vector.load %arg6[%c0_10, %c0_11] : memref<1x32xf32, #tpu.memory_space<vmem>>, vector<1x32xf32>
    %cst_12 = arith.constant dense<0.000000e+00> : vector<1x128xf32>
    %14 = tpu.matmul %13, %12, %cst_12 {dimension_numbers = #tpu.dot_dimension_numbers<[1], [0], [0], [1], [0, 0, 1, 1], [], []>, precision = #tpu.contract_precision<fp32>} : vector<1x32xf32>, vector<32x128xf32>, vector<1x128xf32> -> vector<1x128xf32>
    %c0_13 = arith.constant 0 : index
    %c0_14 = arith.constant 0 : index
    %15 = vector.load %arg7[%c0_13, %c0_14] : memref<1x1xf32, #tpu.memory_space<vmem>>, vector<1x1xf32>
    %16 = vector.broadcast %15 : vector<1x1xf32> to vector<1x128xf32>
    %17 = arith.addf %14, %16 : vector<1x128xf32>
    %cst_15 = arith.constant 5.000000e-01 : f32
    %18 = vector.broadcast %cst_15 : f32 to vector<1x128xf32>
    %19 = arith.mulf %18, %17 : vector<1x128xf32>
    %20 = math.tanh %19 : vector<1x128xf32>
    %cst_16 = arith.constant 1.000000e+00 : f32
    %21 = vector.broadcast %cst_16 : f32 to vector<1x128xf32>
    %22 = arith.addf %20, %21 : vector<1x128xf32>
    %cst_17 = arith.constant 5.000000e-01 : f32
    %23 = vector.broadcast %cst_17 : f32 to vector<1x128xf32>
    %24 = arith.mulf %23, %22 : vector<1x128xf32>
    %c0_18 = arith.constant 0 : index
    %c0_19 = arith.constant 0 : index
    %25 = vector.load %arg8[%c0_18, %c0_19] : memref<1x128xf32, #tpu.memory_space<vmem>>, vector<1x128xf32>
    tpu.vector_store %arg8[%c0_18, %c0_19], %24 {strides = array<i32>} : memref<1x128xf32, #tpu.memory_space<vmem>>, vector<1x128xf32>,
    return
  }
  func.func @transform_0(%arg0: i32) -> (i32, i32) {
    %c0_i32 = arith.constant 0 : i32
    %c0_i32_0 = arith.constant 0 : i32
    return %arg0, %c0_i32 : i32, i32
  }
  func.func @transform_1(%arg0: i32) -> (i32, i32) {
    %c0_i32 = arith.constant 0 : i32
    %c0_i32_0 = arith.constant 0 : i32
    %c0_i32_1 = arith.constant 0 : i32
    return %c0_i32, %c0_i32_0 : i32, i32
  }
  func.func @transform_2(%arg0: i32) -> (i32, i32) {
    %c0_i32 = arith.constant 0 : i32
    %c0_i32_0 = arith.constant 0 : i32
    %c0_i32_1 = arith.constant 0 : i32
    return %c0_i32, %c0_i32_0 : i32, i32
  }
  func.func @transform_3(%arg0: i32) -> (i32, i32) {
    %c0_i32 = arith.constant 0 : i32
    %c0_i32_0 = arith.constant 0 : i32
    %c0_i32_1 = arith.constant 0 : i32
    return %c0_i32, %c0_i32_0 : i32, i32
  }
  func.func @transform_4(%arg0: i32) -> (i32, i32) {
    %c0_i32 = arith.constant 0 : i32
    %c0_i32_0 = arith.constant 0 : i32
    %c0_i32_1 = arith.constant 0 : i32
    return %c0_i32, %c0_i32_0 : i32, i32
  }
  func.func @transform_5(%arg0: i32) -> (i32, i32) {
    %c0_i32 = arith.constant 0 : i32
    %c0_i32_0 = arith.constant 0 : i32
    %c0_i32_1 = arith.constant 0 : i32
    return %c0_i32, %c0_i32_0 : i32, i32
  }
  func.func @transform_6(%arg0: i32) -> (i32, i32) {
    %c0_i32 = arith.constant 0 : i32
    %c0_i32_0 = arith.constant 0 : i32
    %c0_i32_1 = arith.constant 0 : i32
    return %c0_i32, %c0_i32_0 : i32, i32
  }
  func.func @transform_7(%arg0: i32) -> (i32, i32) {
    %c0_i32 = arith.constant 0 : i32
    %c0_i32_0 = arith.constant 0 : i32
    return %c0_i32, %arg0 : i32, i32
  }
}

</mosaic_0001>

<llo_original>
// kernel: tpu_custom_call.1
$region0: #{tpu_custom_call.1}
  #allocation0 [shape = 'u32[]', space=smem, size = 0x4, offset = 0x4, fixed_abs, tag = 'smem constant byte address 0x4 - core index']
  #allocation1 [shape = 'u32[144,128]{1,0:T(1,128)}', space=vmem, size = 0x12000, scoped, tag = 'internal scratch']
  #allocation2 [shape = 'f32[1,1]{1,0:T(1,128)S(1)}', space=vmem, size = 0x200, scoped, tag = 'scoped memory for tpu_custom_call.1']
  %s0 = inlined_call_operand.vmem [shape: f32[8,16], index: 0, kind: input, shape index: {}]
  %s1 = inlined_call_operand.vmem [shape: f32[32,16], index: 1, kind: input, shape index: {}]
  %s2 = inlined_call_operand.vmem [shape: f32[32,1], index: 2, kind: input, shape index: {}]
  %s3 = inlined_call_operand.vmem [shape: f32[32,32], index: 3, kind: input, shape index: {}]
  %s4 = inlined_call_operand.vmem [shape: f32[32,1], index: 4, kind: input, shape index: {}]
  %s5 = inlined_call_operand.vmem [shape: f32[1,32], index: 5, kind: input, shape index: {}]
  %s6 = inlined_call_operand.<no memory space> [shape: f32[1,1], index: 6, kind: input, shape index: {}]
  %s7 = inlined_call_operand.hbm [shape: f32[1,128], index: 7, kind: output, shape index: {}]
  %s8 = sld [smem:[#allocation0]]
  $region38: #{tpu_custom_call.1} parent=0
    _
  %s10 = ssub.s32 1, %s8
  %s11 = scalar_select 0, %s10, %s8
  %v12 = vstv %s6
  %13 = vst [vmem:[#allocation2] sm:$0x1] %v12
  $region1: #{tpu_custom_call.1} parent=0
    #allocation3 [shape = 'u8[512]{0}', space=vmem, size = 0x400, scoped, tag = 'output window, operand 0, single buffered']
    #allocation4 [shape = 's32[1]{0}', space=sflag, size = 0x4, scoped, tag = 'scoped memory for tpu_custom_call.1']
    %14 = vsyncpa [#allocation4], 0
    // Predicated region
    $region2: #{tpu_custom_call.1} parent=1 // pred_check
      _
    $region3: #{tpu_custom_call.1} parent=1 // pred_check_branch
      %16 = sbr.rel (0) target = $region5
    $region4: #{tpu_custom_call.1} parent=1 // pred_region
      _
    $region5: #{tpu_custom_call.1} parent=1 // pred_fallthru
      _
    // Predicated region
    $region6: #{tpu_custom_call.1} parent=1 // pred_check
      _
    $region7: #{tpu_custom_call.1} parent=1 // pred_check_branch
      %18 = sbr.rel (0) target = $region9
    $region8: #{tpu_custom_call.1} parent=1 // pred_region
      _
    $region9: #{tpu_custom_call.1} parent=1 // pred_fallthru
      _
    // Predicated region
    $region10: #{tpu_custom_call.1} parent=1 // pred_check
      _
    $region11: #{tpu_custom_call.1} parent=1 // pred_check_branch
      %20 = sbr.rel (0) target = $region13
    $region12: #{tpu_custom_call.1} parent=1 // pred_region
      _
    $region13: #{tpu_custom_call.1} parent=1 // pred_fallthru
      _
    // Predicated region
    $region14: #{tpu_custom_call.1} parent=1 // pred_check
      _
    $region15: #{tpu_custom_call.1} parent=1 // pred_check_branch
      %22 = sbr.rel (0) target = $region17
    $region16: #{tpu_custom_call.1} parent=1 // pred_region
      _
    $region17: #{tpu_custom_call.1} parent=1 // pred_fallthru
      _
    // Predicated region
    $region18: #{tpu_custom_call.1} parent=1 // pred_check
      _
    $region19: #{tpu_custom_call.1} parent=1 // pred_check_branch
      %24 = sbr.rel (0) target = $region21
    $region20: #{tpu_custom_call.1} parent=1 // pred_region
      _
    $region21: #{tpu_custom_call.1} parent=1 // pred_fallthru
      _
    // Predicated region
    $region22: #{tpu_custom_call.1} parent=1 // pred_check
      _
    $region23: #{tpu_custom_call.1} parent=1 // pred_check_branch
      %26 = sbr.rel (0) target = $region25
    $region24: #{tpu_custom_call.1} parent=1 // pred_region
      _
    $region25: #{tpu_custom_call.1} parent=1 // pred_fallthru
      _
    // Predicated region
    $region26: #{tpu_custom_call.1} parent=1 // pred_check
      _
    $region27: #{tpu_custom_call.1} parent=1 // pred_check_branch
      %28 = sbr.rel (0) target = $region29
    $region28: #{tpu_custom_call.1} parent=1 // pred_region
      _
    $region29: #{tpu_custom_call.1} parent=1 // pred_fallthru
      _
    %v29 = vld [vmem:[%s0] sm:$0xff]
    %v30 = vld [vmem:[%s0 + $0x8] sm:$0xff]
    %v31 = vld [vmem:[%s0 + $0x10] sm:$0xff]
    %v32 = vld [vmem:[%s0 + $0x18] sm:$0xff]
    %v33 = vld [vmem:[%s0 + $0x20] sm:$0xff]
    %v34 = vld [vmem:[%s0 + $0x28] sm:$0xff]
    %v35 = vld [vmem:[%s0 + $0x30] sm:$0xff]
    %v36 = vld [vmem:[%s0 + $0x38] sm:$0xff]
    %v37 = vld [vmem:[%s0 + $0x40] sm:$0xff]
    %v38 = vld [vmem:[%s0 + $0x48] sm:$0xff]
    %v39 = vld [vmem:[%s0 + $0x50] sm:$0xff]
    %v40 = vld [vmem:[%s0 + $0x58] sm:$0xff]
    %v41 = vld [vmem:[%s0 + $0x60] sm:$0xff]
    %v42 = vld [vmem:[%s0 + $0x68] sm:$0xff]
    %v43 = vld [vmem:[%s0 + $0x70] sm:$0xff]
    %v44 = vld [vmem:[%s0 + $0x78] sm:$0xff]
    %v45 = vld [vmem:[%s1] sm:$0xff]
    %v46 = vld [vmem:[%s1 + $0x8] sm:$0xff]
    %v47 = vld [vmem:[%s1 + $0x10] sm:$0xff]
    %v48 = vld [vmem:[%s1 + $0x18] sm:$0xff]
    %v49 = vld [vmem:[%s2] sm:$0xff]
    %v50 = vld [vmem:[%s2 + $0x8] sm:$0xff]
    %v51 = vld [vmem:[%s2 + $0x10] sm:$0xff]
    %v52 = vld [vmem:[%s2 + $0x18] sm:$0xff]
    %54 = vset.pattern.permute.xlu0 0
    %55 = vperm.xlu0 %54, %v49
    %v56 = vpop.permute.xlu0 %55
    %59 = vset.pattern.permute.xlu0 0
    %60 = vperm.xlu0 %59, %v50
    %v61 = vpop.permute.xlu0 %60
    %64 = vset.pattern.permute.xlu0 0
    %65 = vperm.xlu0 %64, %v51
    %v66 = vpop.permute.xlu0 %65
    %69 = vset.pattern.permute.xlu0 0
    %70 = vperm.xlu0 %69, %v52
    %v71 = vpop.permute.xlu0 %70
    %vm73 = vcmask 130048
    %v75 = vsel %vm73, %v45, 0
    %v78 = vsel %vm73, %v46, 0
    %v81 = vsel %vm73, %v47, 0
    %v84 = vsel %vm73, %v48, 0
    %v87 = vsel %vm73, %v29, 0
    %v90 = vsel %vm73, %v30, 0
    %v93 = vsel %vm73, %v31, 0
    %v96 = vsel %vm73, %v32, 0
    %v99 = vsel %vm73, %v33, 0
    %v102 = vsel %vm73, %v34, 0
    %v105 = vsel %vm73, %v35, 0
    %v108 = vsel %vm73, %v36, 0
    %v111 = vsel %vm73, %v37, 0
    %v114 = vsel %vm73, %v38, 0
    %v117 = vsel %vm73, %v39, 0
    %v120 = vsel %vm73, %v40, 0
    %v123 = vsel %vm73, %v41, 0
    %v126 = vsel %vm73, %v42, 0
    %v129 = vsel %vm73, %v43, 0
    %v132 = vsel %vm73, %v44, 0
    %134 = vmatprep.subr.mxu0 0.0
    %v135 = vand.u32 %v87, 4294901760
    %136 = vmatpush1.xpose.msra.mxu0 %v135
    %137 = vmatprep.subr.mxu0 0.0
    %v138 = vand.u32 %v90, 4294901760
    %139 = vmatpush1.xpose.msra.mxu0 %v138
    %140 = vmatprep.subr.mxu0 0.0
    %v141 = vand.u32 %v93, 4294901760
    %142 = vmatpush1.xpose.msra.mxu0 %v141
    %143 = vmatprep.subr.mxu0 0.0
    %v144 = vand.u32 %v96, 4294901760
    %145 = vmatpush1.xpose.msra.mxu0 %v144
    %146 = vmatprep.subr.mxu0 0.0
    %v147 = vand.u32 %v99, 4294901760
    %148 = vmatpush1.xpose.msra.mxu0 %v147
    %149 = vmatprep.subr.mxu0 0.0
    %v150 = vand.u32 %v102, 4294901760
    %151 = vmatpush1.xpose.msra.mxu0 %v150
    %152 = vmatprep.subr.mxu0 0.0
    %v153 = vand.u32 %v105, 4294901760
    %154 = vmatpush1.xpose.msra.mxu0 %v153
    %155 = vmatprep.subr.mxu0 0.0
    %v156 = vand.u32 %v108, 4294901760
    %157 = vmatpush1.xpose.msra.mxu0 %v156
    %158 = vmatprep.subr.mxu0 0.0
    %v159 = vand.u32 %v111, 4294901760
    %160 = vmatpush1.xpose.msra.mxu0 %v159
    %161 = vmatprep.subr.mxu0 0.0
    %v162 = vand.u32 %v114, 4294901760
    %163 = vmatpush1.xpose.msra.mxu0 %v162
    %164 = vmatprep.subr.mxu0 0.0
    %v165 = vand.u32 %v117, 4294901760
    %166 = vmatpush1.xpose.msra.mxu0 %v165
    %167 = vmatprep.subr.mxu0 0.0
    %v168 = vand.u32 %v120, 4294901760
    %169 = vmatpush1.xpose.msra.mxu0 %v168
    %170 = vmatprep.subr.mxu0 0.0
    %v171 = vand.u32 %v123, 4294901760
    %172 = vmatpush1.xpose.msra.mxu0 %v171
    %173 = vmatprep.subr.mxu0 0.0
    %v174 = vand.u32 %v126, 4294901760
    %175 = vmatpush1.xpose.msra.mxu0 %v174
    %176 = vmatprep.subr.mxu0 0.0
    %v177 = vand.u32 %v129, 4294901760
    %178 = vmatpush1.xpose.msra.mxu0 %v177
    %179 = vmatprep.subr.mxu0 0.0
    %v180 = vand.u32 %v132, 4294901760
    %181 = vmatpush1.xpose.msra.mxu0 %v180
    %182 = vmatprep.subr.mxu0 0.0
    %183 = vmatpush1.xpose.msra.mxu0 0.0
    %184 = vmatprep.subr.mxu0 0.0
    %185 = vmatpush1.xpose.msra.mxu0 0.0
    %186 = vmatprep.subr.mxu0 0.0
    %187 = vmatpush1.xpose.msra.mxu0 0.0
    %188 = vmatprep.subr.mxu0 0.0
    %189 = vmatpush1.xpose.msra.mxu0 0.0
    %190 = vmatprep.subr.mxu0 0.0
    %191 = vmatpush1.xpose.msra.mxu0 0.0
    %192 = vmatprep.subr.mxu0 0.0
    %193 = vmatpush1.xpose.msra.mxu0 0.0
    %194 = vmatprep.subr.mxu0 0.0
    %195 = vmatpush1.xpose.msra.mxu0 0.0
    %196 = vmatprep.subr.mxu0 0.0
    %197 = vmatpush1.xpose.msra.mxu0 0.0
    %198 = vmatprep.subr.mxu0 0.0
    %199 = vmatpush1.xpose.msra.mxu0 0.0
    %200 = vmatprep.subr.mxu0 0.0
    %201 = vmatpush1.xpose.msra.mxu0 0.0
    %202 = vmatprep.subr.mxu0 0.0
    %203 = vmatpush1.xpose.msra.mxu0 0.0
    %204 = vmatprep.subr.mxu0 0.0
    %205 = vmatpush1.xpose.msra.mxu0 0.0
    %206 = vmatprep.subr.mxu0 0.0
    %207 = vmatpush1.xpose.msra.mxu0 0.0
    %208 = vmatprep.subr.mxu0 0.0
    %209 = vmatpush1.xpose.msra.mxu0 0.0
    %210 = vmatprep.subr.mxu0 0.0
    %211 = vmatpush1.xpose.msra.mxu0 0.0
    %212 = vmatprep.subr.mxu0 0.0
    %213 = vmatpush1.xpose.msra.mxu0 0.0
    %214 = vmatprep.mubr.f32.mxu0 0.0
    %v215 = vand.u32 %v75, 4294901760
    %v216 = vsub.f32 %v75, %v215
    %v217 = vand.u32 %v216, 4294901760
    %v218 = vsub.f32 %v216, %v217
    %v219 = vand.u32 %v218, 4294901760
    %220 = vmatmul.mubr.f32.gmra.mrb[0].mxu0 %v219
    %v221 = vpop.f32.mrb[0].mxu0
    %v222 = vadd.f32 %v56, %v221
    %v223 = vpop.f32.mrb[0].mxu0
    %224 = vmatprep.mubr.f32.mxu0 0.0
    %v225 = vand.u32 %v78, 4294901760
    %v226 = vsub.f32 %v78, %v225
    %v227 = vand.u32 %v226, 4294901760
    %v228 = vsub.f32 %v226, %v227
    %v229 = vand.u32 %v228, 4294901760
    %230 = vmatmul.mubr.f32.gmra.mrb[0].mxu0 %v229
    %v231 = vpop.f32.mrb[0].mxu0
    %v232 = vadd.f32 %v61, %v231
    %v233 = vpop.f32.mrb[0].mxu0
    %234 = vmatprep.mubr.f32.mxu0 0.0
    %v235 = vand.u32 %v81, 4294901760
    %v236 = vsub.f32 %v81, %v235
    %v237 = vand.u32 %v236, 4294901760
    %v238 = vsub.f32 %v236, %v237
    %v239 = vand.u32 %v238, 4294901760
    %240 = vmatmul.mubr.f32.gmra.mrb[0].mxu0 %v239
    %v241 = vpop.f32.mrb[0].mxu0
    %v242 = vadd.f32 %v66, %v241
    %v243 = vpop.f32.mrb[0].mxu0
    %244 = vmatprep.mubr.f32.mxu0 0.0
    %v245 = vand.u32 %v84, 4294901760
    %v246 = vsub.f32 %v84, %v245
    %v247 = vand.u32 %v246, 4294901760
    %v248 = vsub.f32 %v246, %v247
    %v249 = vand.u32 %v248, 4294901760
    %250 = vmatmul.mubr.f32.gmra.mrb[0].mxu0 %v249
    %v251 = vpop.f32.mrb[0].mxu0
    %v252 = vadd.f32 %v71, %v251
    %v253 = vpop.f32.mrb[0].mxu0
    %254 = vdwg.mxu0
    %255 = vmatprep.subr.mxu0 0.0
    %v256 = vand.u32 %v87, 4294901760
    %v257 = vsub.f32 %v87, %v256
    %v258 = vand.u32 %v257, 4294901760
    %v259 = vsub.f32 %v257, %v258
    %v260 = vand.u32 %v259, 4294901760
    %261 = vmatpush1.xpose.msra.mxu0 %v260
    %262 = vmatprep.subr.mxu0 0.0
    %v263 = vand.u32 %v90, 4294901760
    %v264 = vsub.f32 %v90, %v263
    %v265 = vand.u32 %v264, 4294901760
    %v266 = vsub.f32 %v264, %v265
    %v267 = vand.u32 %v266, 4294901760
    %268 = vmatpush1.xpose.msra.mxu0 %v267
    %269 = vmatprep.subr.mxu0 0.0
    %v270 = vand.u32 %v93, 4294901760
    %v271 = vsub.f32 %v93, %v270
    %v272 = vand.u32 %v271, 4294901760
    %v273 = vsub.f32 %v271, %v272
    %v274 = vand.u32 %v273, 4294901760
    %275 = vmatpush1.xpose.msra.mxu0 %v274
    %276 = vmatprep.subr.mxu0 0.0
    %v277 = vand.u32 %v96, 4294901760
    %v278 = vsub.f32 %v96, %v277
    %v279 = vand.u32 %v278, 4294901760
    %v280 = vsub.f32 %v278, %v279
    %v281 = vand.u32 %v280, 4294901760
    %282 = vmatpush1.xpose.msra.mxu0 %v281
    %283 = vmatprep.subr.mxu0 0.0
    %v284 = vand.u32 %v99, 4294901760
    %v285 = vsub.f32 %v99, %v284
    %v286 = vand.u32 %v285, 4294901760
    %v287 = vsub.f32 %v285, %v286
    %v288 = vand.u32 %v287, 4294901760
    %289 = vmatpush1.xpose.msra.mxu0 %v288
    %290 = vmatprep.subr.mxu0 0.0
    %v291 = vand.u32 %v102, 4294901760
    %v292 = vsub.f32 %v102, %v291
    %v293 = vand.u32 %v292, 4294901760
    %v294 = vsub.f32 %v292, %v293
    %v295 = vand.u32 %v294, 4294901760
    %296 = vmatpush1.xpose.msra.mxu0 %v295
    %297 = vmatprep.subr.mxu0 0.0
    %v298 = vand.u32 %v105, 4294901760
    %v299 = vsub.f32 %v105, %v298
    %v300 = vand.u32 %v299, 4294901760
    %v301 = vsub.f32 %v299, %v300
    %v302 = vand.u32 %v301, 4294901760
    %303 = vmatpush1.xpose.msra.mxu0 %v302
    %304 = vmatprep.subr.mxu0 0.0
    %v305 = vand.u32 %v108, 4294901760
    %v306 = vsub.f32 %v108, %v305
    %v307 = vand.u32 %v306, 4294901760
    %v308 = vsub.f32 %v306, %v307
    %v309 = vand.u32 %v308, 4294901760
    %310 = vmatpush1.xpose.msra.mxu0 %v309
    %311 = vmatprep.subr.mxu0 0.0
    %v312 = vand.u32 %v111, 4294901760
    %v313 = vsub.f32 %v111, %v312
    %v314 = vand.u32 %v313, 4294901760
    %v315 = vsub.f32 %v313, %v314
    %v316 = vand.u32 %v315, 4294901760
    %317 = vmatpush1.xpose.msra.mxu0 %v316
    %318 = vmatprep.subr.mxu0 0.0
    %v319 = vand.u32 %v114, 4294901760
    %v320 = vsub.f32 %v114, %v319
    %v321 = vand.u32 %v320, 4294901760
    %v322 = vsub.f32 %v320, %v321
    %v323 = vand.u32 %v322, 4294901760
    %324 = vmatpush1.xpose.msra.mxu0 %v323
    %325 = vmatprep.subr.mxu0 0.0
    %v326 = vand.u32 %v117, 4294901760
    %v327 = vsub.f32 %v117, %v326
    %v328 = vand.u32 %v327, 4294901760
    %v329 = vsub.f32 %v327, %v328
    %v330 = vand.u32 %v329, 4294901760
    %331 = vmatpush1.xpose.msra.mxu0 %v330
    %332 = vmatprep.subr.mxu0 0.0
    %v333 = vand.u32 %v120, 4294901760
    %v334 = vsub.f32 %v120, %v333
    %v335 = vand.u32 %v334, 4294901760
    %v336 = vsub.f32 %v334, %v335
    %v337 = vand.u32 %v336, 4294901760
    %338 = vmatpush1.xpose.msra.mxu0 %v337
    %339 = vmatprep.subr.mxu0 0.0
    %v340 = vand.u32 %v123, 4294901760
    %v341 = vsub.f32 %v123, %v340
    %v342 = vand.u32 %v341, 4294901760
    %v343 = vsub.f32 %v341, %v342
    %v344 = vand.u32 %v343, 4294901760
    %345 = vmatpush1.xpose.msra.mxu0 %v344
    %346 = vmatprep.subr.mxu0 0.0
    %v347 = vand.u32 %v126, 4294901760
    %v348 = vsub.f32 %v126, %v347
    %v349 = vand.u32 %v348, 4294901760
    %v350 = vsub.f32 %v348, %v349
    %v351 = vand.u32 %v350, 4294901760
    %352 = vmatpush1.xpose.msra.mxu0 %v351
    %353 = vmatprep.subr.mxu0 0.0
    %v354 = vand.u32 %v129, 4294901760
    %v355 = vsub.f32 %v129, %v354
    %v356 = vand.u32 %v355, 4294901760
    %v357 = vsub.f32 %v355, %v356
    %v358 = vand.u32 %v357, 4294901760
    %359 = vmatpush1.xpose.msra.mxu0 %v358
    %360 = vmatprep.subr.mxu0 0.0
    %v361 = vand.u32 %v132, 4294901760
    %v362 = vsub.f32 %v132, %v361
    %v363 = vand.u32 %v362, 4294901760
    %v364 = vsub.f32 %v362, %v363
    %v365 = vand.u32 %v364, 4294901760
    %366 = vmatpush1.xpose.msra.mxu0 %v365
    %367 = vmatprep.subr.mxu0 0.0
    %368 = vmatpush1.xpose.msra.mxu0 0.0
    %369 = vmatprep.subr.mxu0 0.0
    %370 = vmatpush1.xpose.msra.mxu0 0.0
    %371 = vmatprep.subr.mxu0 0.0
    %372 = vmatpush1.xpose.msra.mxu0 0.0
    %373 = vmatprep.subr.mxu0 0.0
    %374 = vmatpush1.xpose.msra.mxu0 0.0
    %375 = vmatprep.subr.mxu0 0.0
    %376 = vmatpush1.xpose.msra.mxu0 0.0
    %377 = vmatprep.subr.mxu0 0.0
    %378 = vmatpush1.xpose.msra.mxu0 0.0
    %379 = vmatprep.subr.mxu0 0.0
    %380 = vmatpush1.xpose.msra.mxu0 0.0
    %381 = vmatprep.subr.mxu0 0.0
    %382 = vmatpush1.xpose.msra.mxu0 0.0
    %383 = vmatprep.subr.mxu0 0.0
    %384 = vmatpush1.xpose.msra.mxu0 0.0
    %385 = vmatprep.subr.mxu0 0.0
    %386 = vmatpush1.xpose.msra.mxu0 0.0
    %387 = vmatprep.subr.mxu0 0.0
    %388 = vmatpush1.xpose.msra.mxu0 0.0
    %389 = vmatprep.subr.mxu0 0.0
    %390 = vmatpush1.xpose.msra.mxu0 0.0
    %391 = vmatprep.subr.mxu0 0.0
    %392 = vmatpush1.xpose.msra.mxu0 0.0
    %393 = vmatprep.subr.mxu0 0.0
    %394 = vmatpush1.xpose.msra.mxu0 0.0
    %395 = vmatprep.subr.mxu0 0.0
    %396 = vmatpush1.xpose.msra.mxu0 0.0
    %397 = vmatprep.subr.mxu0 0.0
    %398 = vmatpush1.xpose.msra.mxu0 0.0
    %399 = vmatprep.mubr.f32.mxu0 0.0
    %v400 = vand.u32 %v75, 4294901760
    %401 = vmatmul.mubr.f32.gmra.mrb[0].mxu0 %v400
    %v402 = vpop.f32.mrb[0].mxu0
    %v403 = vadd.f32 %v222, %v402
    %v404 = vpop.f32.mrb[0].mxu0
    %405 = vmatprep.mubr.f32.mxu0 0.0
    %v406 = vand.u32 %v78, 4294901760
    %407 = vmatmul.mubr.f32.gmra.mrb[0].mxu0 %v406
    %v408 = vpop.f32.mrb[0].mxu0
    %v409 = vadd.f32 %v232, %v408
    %v410 = vpop.f32.mrb[0].mxu0
    %411 = vmatprep.mubr.f32.mxu0 0.0
    %v412 = vand.u32 %v81, 4294901760
    %413 = vmatmul.mubr.f32.gmra.mrb[0].mxu0 %v412
    %v414 = vpop.f32.mrb[0].mxu0
    %v415 = vadd.f32 %v242, %v414
    %v416 = vpop.f32.mrb[0].mxu0
    %417 = vmatprep.mubr.f32.mxu0 0.0
    %v418 = vand.u32 %v84, 4294901760
    %419 = vmatmul.mubr.f32.gmra.mrb[0].mxu0 %v418
    %v420 = vpop.f32.mrb[0].mxu0
    %v421 = vadd.f32 %v252, %v420
    %v422 = vpop.f32.mrb[0].mxu0
    %423 = vdwg.mxu0
    %424 = vmatprep.subr.mxu0 0.0
    %v425 = vand.u32 %v87, 4294901760
    %v426 = vsub.f32 %v87, %v425
    %427 = vmatpush1.xpose.msra.mxu0 %v426
    %428 = vmatprep.subr.mxu0 0.0
    %v429 = vand.u32 %v90, 4294901760
    %v430 = vsub.f32 %v90, %v429
    %431 = vmatpush1.xpose.msra.mxu0 %v430
    %432 = vmatprep.subr.mxu0 0.0
    %v433 = vand.u32 %v93, 4294901760
    %v434 = vsub.f32 %v93, %v433
    %435 = vmatpush1.xpose.msra.mxu0 %v434
    %436 = vmatprep.subr.mxu0 0.0
    %v437 = vand.u32 %v96, 4294901760
    %v438 = vsub.f32 %v96, %v437
    %439 = vmatpush1.xpose.msra.mxu0 %v438
    %440 = vmatprep.subr.mxu0 0.0
    %v441 = vand.u32 %v99, 4294901760
    %v442 = vsub.f32 %v99, %v441
    %443 = vmatpush1.xpose.msra.mxu0 %v442
    %444 = vmatprep.subr.mxu0 0.0
    %v445 = vand.u32 %v102, 4294901760
    %v446 = vsub.f32 %v102, %v445
    %447 = vmatpush1.xpose.msra.mxu0 %v446
    %448 = vmatprep.subr.mxu0 0.0
    %v449 = vand.u32 %v105, 4294901760
    %v450 = vsub.f32 %v105, %v449
    %451 = vmatpush1.xpose.msra.mxu0 %v450
    %452 = vmatprep.subr.mxu0 0.0
    %v453 = vand.u32 %v108, 4294901760
    %v454 = vsub.f32 %v108, %v453
    %455 = vmatpush1.xpose.msra.mxu0 %v454
    %456 = vmatprep.subr.mxu0 0.0
    %v457 = vand.u32 %v111, 4294901760
    %v458 = vsub.f32 %v111, %v457
    %459 = vmatpush1.xpose.msra.mxu0 %v458
    %460 = vmatprep.subr.mxu0 0.0
    %v461 = vand.u32 %v114, 4294901760
    %v462 = vsub.f32 %v114, %v461
    %463 = vmatpush1.xpose.msra.mxu0 %v462
    %464 = vmatprep.subr.mxu0 0.0
    %v465 = vand.u32 %v117, 4294901760
    %v466 = vsub.f32 %v117, %v465
    %467 = vmatpush1.xpose.msra.mxu0 %v466
    %468 = vmatprep.subr.mxu0 0.0
    %v469 = vand.u32 %v120, 4294901760
    %v470 = vsub.f32 %v120, %v469
    %471 = vmatpush1.xpose.msra.mxu0 %v470
    %472 = vmatprep.subr.mxu0 0.0
    %v473 = vand.u32 %v123, 4294901760
    %v474 = vsub.f32 %v123, %v473
    %475 = vmatpush1.xpose.msra.mxu0 %v474
    %476 = vmatprep.subr.mxu0 0.0
    %v477 = vand.u32 %v126, 4294901760
    %v478 = vsub.f32 %v126, %v477
    %479 = vmatpush1.xpose.msra.mxu0 %v478
    %480 = vmatprep.subr.mxu0 0.0
    %v481 = vand.u32 %v129, 4294901760
    %v482 = vsub.f32 %v129, %v481
    %483 = vmatpush1.xpose.msra.mxu0 %v482
    %484 = vmatprep.subr.mxu0 0.0
    %v485 = vand.u32 %v132, 4294901760
    %v486 = vsub.f32 %v132, %v485
    %487 = vmatpush1.xpose.msra.mxu0 %v486
    %488 = vmatprep.subr.mxu0 0.0
    %489 = vmatpush1.xpose.msra.mxu0 0.0
    %490 = vmatprep.subr.mxu0 0.0
    %491 = vmatpush1.xpose.msra.mxu0 0.0
    %492 = vmatprep.subr.mxu0 0.0
    %493 = vmatpush1.xpose.msra.mxu0 0.0
    %494 = vmatprep.subr.mxu0 0.0
    %495 = vmatpush1.xpose.msra.mxu0 0.0
    %496 = vmatprep.subr.mxu0 0.0
    %497 = vmatpush1.xpose.msra.mxu0 0.0
    %498 = vmatprep.subr.mxu0 0.0
    %499 = vmatpush1.xpose.msra.mxu0 0.0
    %500 = vmatprep.subr.mxu0 0.0
    %501 = vmatpush1.xpose.msra.mxu0 0.0
    %502 = vmatprep.subr.mxu0 0.0
    %503 = vmatpush1.xpose.msra.mxu0 0.0
    %504 = vmatprep.subr.mxu0 0.0
    %505 = vmatpush1.xpose.msra.mxu0 0.0
    %506 = vmatprep.subr.mxu0 0.0
    %507 = vmatpush1.xpose.msra.mxu0 0.0
    %508 = vmatprep.subr.mxu0 0.0
    %509 = vmatpush1.xpose.msra.mxu0 0.0
    %510 = vmatprep.subr.mxu0 0.0
    %511 = vmatpush1.xpose.msra.mxu0 0.0
    %512 = vmatprep.subr.mxu0 0.0
    %513 = vmatpush1.xpose.msra.mxu0 0.0
    %514 = vmatprep.subr.mxu0 0.0
    %515 = vmatpush1.xpose.msra.mxu0 0.0
    %516 = vmatprep.subr.mxu0 0.0
    %517 = vmatpush1.xpose.msra.mxu0 0.0
    %518 = vmatprep.subr.mxu0 0.0
    %519 = vmatpush1.xpose.msra.mxu0 0.0
    %520 = vmatprep.mubr.f32.mxu0 0.0
    %v521 = vand.u32 %v75, 4294901760
    %v522 = vsub.f32 %v75, %v521
    %523 = vmatmul.mubr.f32.gmra.mrb[0].mxu0 %v522
    %v524 = vpop.f32.mrb[0].mxu0
    %v525 = vadd.f32 %v403, %v524
    %v526 = vpop.f32.mrb[0].mxu0
    %527 = vmatprep.mubr.f32.mxu0 0.0
    %v528 = vand.u32 %v78, 4294901760
    %v529 = vsub.f32 %v78, %v528
    %530 = vmatmul.mubr.f32.gmra.mrb[0].mxu0 %v529
    %v531 = vpop.f32.mrb[0].mxu0
    %v532 = vadd.f32 %v409, %v531
    %v533 = vpop.f32.mrb[0].mxu0
    %534 = vmatprep.mubr.f32.mxu0 0.0
    %v535 = vand.u32 %v81, 4294901760
    %v536 = vsub.f32 %v81, %v535
    %537 = vmatmul.mubr.f32.gmra.mrb[0].mxu0 %v536
    %v538 = vpop.f32.mrb[0].mxu0
    %v539 = vadd.f32 %v415, %v538
    %v540 = vpop.f32.mrb[0].mxu0
    %541 = vmatprep.mubr.f32.mxu0 0.0
    %v542 = vand.u32 %v84, 4294901760
    %v543 = vsub.f32 %v84, %v542
    %544 = vmatmul.mubr.f32.gmra.mrb[0].mxu0 %v543
    %v545 = vpop.f32.mrb[0].mxu0
    %v546 = vadd.f32 %v421, %v545
    %v547 = vpop.f32.mrb[0].mxu0
    %548 = vdwg.mxu0
    %549 = vmatprep.subr.mxu0 0.0
    %v550 = vand.u32 %v87, 4294901760
    %551 = vmatpush1.xpose.msra.mxu0 %v550
    %552 = vmatprep.subr.mxu0 0.0
    %v553 = vand.u32 %v90, 4294901760
    %554 = vmatpush1.xpose.msra.mxu0 %v553
    %555 = vmatprep.subr.mxu0 0.0
    %v556 = vand.u32 %v93, 4294901760
    %557 = vmatpush1.xpose.msra.mxu0 %v556
    %558 = vmatprep.subr.mxu0 0.0
    %v559 = vand.u32 %v96, 4294901760
    %560 = vmatpush1.xpose.msra.mxu0 %v559
    %561 = vmatprep.subr.mxu0 0.0
    %v562 = vand.u32 %v99, 4294901760
    %563 = vmatpush1.xpose.msra.mxu0 %v562
    %564 = vmatprep.subr.mxu0 0.0
    %v565 = vand.u32 %v102, 4294901760
    %566 = vmatpush1.xpose.msra.mxu0 %v565
    %567 = vmatprep.subr.mxu0 0.0
    %v568 = vand.u32 %v105, 4294901760
    %569 = vmatpush1.xpose.msra.mxu0 %v568
    %570 = vmatprep.subr.mxu0 0.0
    %v571 = vand.u32 %v108, 4294901760
    %572 = vmatpush1.xpose.msra.mxu0 %v571
    %573 = vmatprep.subr.mxu0 0.0
    %v574 = vand.u32 %v111, 4294901760
    %575 = vmatpush1.xpose.msra.mxu0 %v574
    %576 = vmatprep.subr.mxu0 0.0
    %v577 = vand.u32 %v114, 4294901760
    %578 = vmatpush1.xpose.msra.mxu0 %v577
    %579 = vmatprep.subr.mxu0 0.0
    %v580 = vand.u32 %v117, 4294901760
    %581 = vmatpush1.xpose.msra.mxu0 %v580
    %582 = vmatprep.subr.mxu0 0.0
    %v583 = vand.u32 %v120, 4294901760
    %584 = vmatpush1.xpose.msra.mxu0 %v583
    %585 = vmatprep.subr.mxu0 0.0
    %v586 = vand.u32 %v123, 4294901760
    %587 = vmatpush1.xpose.msra.mxu0 %v586
    %588 = vmatprep.subr.mxu0 0.0
    %v589 = vand.u32 %v126, 4294901760
    %590 = vmatpush1.xpose.msra.mxu0 %v589
    %591 = vmatprep.subr.mxu0 0.0
    %v592 = vand.u32 %v129, 4294901760
    %593 = vmatpush1.xpose.msra.mxu0 %v592
    %594 = vmatprep.subr.mxu0 0.0
    %v595 = vand.u32 %v132, 4294901760
    %596 = vmatpush1.xpose.msra.mxu0 %v595
    %597 = vmatprep.subr.mxu0 0.0
    %598 = vmatpush1.xpose.msra.mxu0 0.0
    %599 = vmatprep.subr.mxu0 0.0
    %600 = vmatpush1.xpose.msra.mxu0 0.0
    %601 = vmatprep.subr.mxu0 0.0
    %602 = vmatpush1.xpose.msra.mxu0 0.0
    %603 = vmatprep.subr.mxu0 0.0
    %604 = vmatpush1.xpose.msra.mxu0 0.0
    %605 = vmatprep.subr.mxu0 0.0
    %606 = vmatpush1.xpose.msra.mxu0 0.0
    %607 = vmatprep.subr.mxu0 0.0
    %608 = vmatpush1.xpose.msra.mxu0 0.0
    %609 = vmatprep.subr.mxu0 0.0
    %610 = vmatpush1.xpose.msra.mxu0 0.0
    %611 = vmatprep.subr.mxu0 0.0
    %612 = vmatpush1.xpose.msra.mxu0 0.0
    %613 = vmatprep.subr.mxu0 0.0
    %614 = vmatpush1.xpose.msra.mxu0 0.0
    %615 = vmatprep.subr.mxu0 0.0
    %616 = vmatpush1.xpose.msra.mxu0 0.0
    %617 = vmatprep.subr.mxu0 0.0
    %618 = vmatpush1.xpose.msra.mxu0 0.0
    %619 = vmatprep.subr.mxu0 0.0
    %620 = vmatpush1.xpose.msra.mxu0 0.0
    %621 = vmatprep.subr.mxu0 0.0
    %622 = vmatpush1.xpose.msra.mxu0 0.0
    %623 = vmatprep.subr.mxu0 0.0
    %624 = vmatpush1.xpose.msra.mxu0 0.0
    %625 = vmatprep.subr.mxu0 0.0
    %626 = vmatpush1.xpose.msra.mxu0 0.0
    %627 = vmatprep.subr.mxu0 0.0
    %628 = vmatpush1.xpose.msra.mxu0 0.0
    %629 = vmatprep.mubr.f32.mxu0 0.0
    %v630 = vand.u32 %v75, 4294901760
    %v631 = vsub.f32 %v75, %v630
    %v632 = vand.u32 %v631, 4294901760
    %633 = vmatmul.mubr.f32.gmra.mrb[0].mxu0 %v632
    %v634 = vpop.f32.mrb[0].mxu0
    %v635 = vadd.f32 %v525, %v634
    %v636 = vpop.f32.mrb[0].mxu0
    %637 = vmatprep.mubr.f32.mxu0 0.0
    %v638 = vand.u32 %v78, 4294901760
    %v639 = vsub.f32 %v78, %v638
    %v640 = vand.u32 %v639, 4294901760
    %641 = vmatmul.mubr.f32.gmra.mrb[0].mxu0 %v640
    %v642 = vpop.f32.mrb[0].mxu0
    %v643 = vadd.f32 %v532, %v642
    %v644 = vpop.f32.mrb[0].mxu0
    %645 = vmatprep.mubr.f32.mxu0 0.0
    %v646 = vand.u32 %v81, 4294901760
    %v647 = vsub.f32 %v81, %v646
    %v648 = vand.u32 %v647, 4294901760
    %649 = vmatmul.mubr.f32.gmra.mrb[0].mxu0 %v648
    %v650 = vpop.f32.mrb[0].mxu0
    %v651 = vadd.f32 %v539, %v650
    %v652 = vpop.f32.mrb[0].mxu0
    %653 = vmatprep.mubr.f32.mxu0 0.0
    %v654 = vand.u32 %v84, 4294901760
    %v655 = vsub.f32 %v84, %v654
    %v656 = vand.u32 %v655, 4294901760
    %657 = vmatmul.mubr.f32.gmra.mrb[0].mxu0 %v656
    %v658 = vpop.f32.mrb[0].mxu0
    %v659 = vadd.f32 %v546, %v658
    %v660 = vpop.f32.mrb[0].mxu0
    %661 = vdwg.mxu0
    %662 = vmatprep.subr.mxu0 0.0
    %v663 = vand.u32 %v87, 4294901760
    %v664 = vsub.f32 %v87, %v663
    %v665 = vand.u32 %v664, 4294901760
    %666 = vmatpush1.xpose.msra.mxu0 %v665
    %667 = vmatprep.subr.mxu0 0.0
    %v668 = vand.u32 %v90, 4294901760
    %v669 = vsub.f32 %v90, %v668
    %v670 = vand.u32 %v669, 4294901760
    %671 = vmatpush1.xpose.msra.mxu0 %v670
    %672 = vmatprep.subr.mxu0 0.0
    %v673 = vand.u32 %v93, 4294901760
    %v674 = vsub.f32 %v93, %v673
    %v675 = vand.u32 %v674, 4294901760
    %676 = vmatpush1.xpose.msra.mxu0 %v675
    %677 = vmatprep.subr.mxu0 0.0
    %v678 = vand.u32 %v96, 4294901760
    %v679 = vsub.f32 %v96, %v678
    %v680 = vand.u32 %v679, 4294901760
    %681 = vmatpush1.xpose.msra.mxu0 %v680
    %682 = vmatprep.subr.mxu0 0.0
    %v683 = vand.u32 %v99, 4294901760
    %v684 = vsub.f32 %v99, %v683
    %v685 = vand.u32 %v684, 4294901760
    %686 = vmatpush1.xpose.msra.mxu0 %v685
    %687 = vmatprep.subr.mxu0 0.0
    %v688 = vand.u32 %v102, 4294901760
    %v689 = vsub.f32 %v102, %v688
    %v690 = vand.u32 %v689, 4294901760
    %691 = vmatpush1.xpose.msra.mxu0 %v690
    %692 = vmatprep.subr.mxu0 0.0
    %v693 = vand.u32 %v105, 4294901760
    %v694 = vsub.f32 %v105, %v693
    %v695 = vand.u32 %v694, 4294901760
    %696 = vmatpush1.xpose.msra.mxu0 %v695
    %697 = vmatprep.subr.mxu0 0.0
    %v698 = vand.u32 %v108, 4294901760
    %v699 = vsub.f32 %v108, %v698
    %v700 = vand.u32 %v699, 4294901760
    %701 = vmatpush1.xpose.msra.mxu0 %v700
    %702 = vmatprep.subr.mxu0 0.0
    %v703 = vand.u32 %v111, 4294901760
    %v704 = vsub.f32 %v111, %v703
    %v705 = vand.u32 %v704, 4294901760
    %706 = vmatpush1.xpose.msra.mxu0 %v705
    %707 = vmatprep.subr.mxu0 0.0
    %v708 = vand.u32 %v114, 4294901760
    %v709 = vsub.f32 %v114, %v708
    %v710 = vand.u32 %v709, 4294901760
    %711 = vmatpush1.xpose.msra.mxu0 %v710
    %712 = vmatprep.subr.mxu0 0.0
    %v713 = vand.u32 %v117, 4294901760
    %v714 = vsub.f32 %v117, %v713
    %v715 = vand.u32 %v714, 4294901760
    %716 = vmatpush1.xpose.msra.mxu0 %v715
    %717 = vmatprep.subr.mxu0 0.0
    %v718 = vand.u32 %v120, 4294901760
    %v719 = vsub.f32 %v120, %v718
    %v720 = vand.u32 %v719, 4294901760
    %721 = vmatpush1.xpose.msra.mxu0 %v720
    %722 = vmatprep.subr.mxu0 0.0
    %v723 = vand.u32 %v123, 4294901760
    %v724 = vsub.f32 %v123, %v723
    %v725 = vand.u32 %v724, 4294901760
    %726 = vmatpush1.xpose.msra.mxu0 %v725
    %727 = vmatprep.subr.mxu0 0.0
    %v728 = vand.u32 %v126, 4294901760
    %v729 = vsub.f32 %v126, %v728
    %v730 = vand.u32 %v729, 4294901760
    %731 = vmatpush1.xpose.msra.mxu0 %v730
    %732 = vmatprep.subr.mxu0 0.0
    %v733 = vand.u32 %v129, 4294901760
    %v734 = vsub.f32 %v129, %v733
    %v735 = vand.u32 %v734, 4294901760
    %736 = vmatpush1.xpose.msra.mxu0 %v735
    %737 = vmatprep.subr.mxu0 0.0
    %v738 = vand.u32 %v132, 4294901760
    %v739 = vsub.f32 %v132, %v738
    %v740 = vand.u32 %v739, 4294901760
    %741 = vmatpush1.xpose.msra.mxu0 %v740
    %742 = vmatprep.subr.mxu0 0.0
    %743 = vmatpush1.xpose.msra.mxu0 0.0
    %744 = vmatprep.subr.mxu0 0.0
    %745 = vmatpush1.xpose.msra.mxu0 0.0
    %746 = vmatprep.subr.mxu0 0.0
    %747 = vmatpush1.xpose.msra.mxu0 0.0
    %748 = vmatprep.subr.mxu0 0.0
    %749 = vmatpush1.xpose.msra.mxu0 0.0
    %750 = vmatprep.subr.mxu0 0.0
    %751 = vmatpush1.xpose.msra.mxu0 0.0
    %752 = vmatprep.subr.mxu0 0.0
    %753 = vmatpush1.xpose.msra.mxu0 0.0
    %754 = vmatprep.subr.mxu0 0.0
    %755 = vmatpush1.xpose.msra.mxu0 0.0
    %756 = vmatprep.subr.mxu0 0.0
    %757 = vmatpush1.xpose.msra.mxu0 0.0
    %758 = vmatprep.subr.mxu0 0.0
    %759 = vmatpush1.xpose.msra.mxu0 0.0
    %760 = vmatprep.subr.mxu0 0.0
    %761 = vmatpush1.xpose.msra.mxu0 0.0
    %762 = vmatprep.subr.mxu0 0.0
    %763 = vmatpush1.xpose.msra.mxu0 0.0
    %764 = vmatprep.subr.mxu0 0.0
    %765 = vmatpush1.xpose.msra.mxu0 0.0
    %766 = vmatprep.subr.mxu0 0.0
    %767 = vmatpush1.xpose.msra.mxu0 0.0
    %768 = vmatprep.subr.mxu0 0.0
    %769 = vmatpush1.xpose.msra.mxu0 0.0
    %770 = vmatprep.subr.mxu0 0.0
    %771 = vmatpush1.xpose.msra.mxu0 0.0
    %772 = vmatprep.subr.mxu0 0.0
    %773 = vmatpush1.xpose.msra.mxu0 0.0
    %774 = vmatprep.mubr.f32.mxu0 0.0
    %v775 = vand.u32 %v75, 4294901760
    %776 = vmatmul.mubr.f32.gmra.mrb[0].mxu0 %v775
    %v777 = vpop.f32.mrb[0].mxu0
    %v778 = vadd.f32 %v635, %v777
    %v779 = vpop.f32.mrb[0].mxu0
    %780 = vmatprep.mubr.f32.mxu0 0.0
    %v781 = vand.u32 %v78, 4294901760
    %782 = vmatmul.mubr.f32.gmra.mrb[0].mxu0 %v781
    %v783 = vpop.f32.mrb[0].mxu0
    %v784 = vadd.f32 %v643, %v783
    %v785 = vpop.f32.mrb[0].mxu0
    %786 = vmatprep.mubr.f32.mxu0 0.0
    %v787 = vand.u32 %v81, 4294901760
    %788 = vmatmul.mubr.f32.gmra.mrb[0].mxu0 %v787
    %v789 = vpop.f32.mrb[0].mxu0
    %v790 = vadd.f32 %v651, %v789
    %v791 = vpop.f32.mrb[0].mxu0
    %792 = vmatprep.mubr.f32.mxu0 0.0
    %v793 = vand.u32 %v84, 4294901760
    %794 = vmatmul.mubr.f32.gmra.mrb[0].mxu0 %v793
    %v795 = vpop.f32.mrb[0].mxu0
    %v796 = vadd.f32 %v659, %v795
    %v797 = vpop.f32.mrb[0].mxu0
    %798 = vdwg.mxu0
    %799 = vmatprep.subr.mxu0 0.0
    %v800 = vand.u32 %v87, 4294901760
    %801 = vmatpush1.xpose.msra.mxu0 %v800
    %802 = vmatprep.subr.mxu0 0.0
    %v803 = vand.u32 %v90, 4294901760
    %804 = vmatpush1.xpose.msra.mxu0 %v803
    %805 = vmatprep.subr.mxu0 0.0
    %v806 = vand.u32 %v93, 4294901760
    %807 = vmatpush1.xpose.msra.mxu0 %v806
    %808 = vmatprep.subr.mxu0 0.0
    %v809 = vand.u32 %v96, 4294901760
    %810 = vmatpush1.xpose.msra.mxu0 %v809
    %811 = vmatprep.subr.mxu0 0.0
    %v812 = vand.u32 %v99, 4294901760
    %813 = vmatpush1.xpose.msra.mxu0 %v812
    %814 = vmatprep.subr.mxu0 0.0
    %v815 = vand.u32 %v102, 4294901760
    %816 = vmatpush1.xpose.msra.mxu0 %v815
    %817 = vmatprep.subr.mxu0 0.0
    %v818 = vand.u32 %v105, 4294901760
    %819 = vmatpush1.xpose.msra.mxu0 %v818
    %820 = vmatprep.subr.mxu0 0.0
    %v821 = vand.u32 %v108, 4294901760
    %822 = vmatpush1.xpose.msra.mxu0 %v821
    %823 = vmatprep.subr.mxu0 0.0
    %v824 = vand.u32 %v111, 4294901760
    %825 = vmatpush1.xpose.msra.mxu0 %v824
    %826 = vmatprep.subr.mxu0 0.0
    %v827 = vand.u32 %v114, 4294901760
    %828 = vmatpush1.xpose.msra.mxu0 %v827
    %829 = vmatprep.subr.mxu0 0.0
    %v830 = vand.u32 %v117, 4294901760
    %831 = vmatpush1.xpose.msra.mxu0 %v830
    %832 = vmatprep.subr.mxu0 0.0
    %v833 = vand.u32 %v120, 4294901760
    %834 = vmatpush1.xpose.msra.mxu0 %v833
    %835 = vmatprep.subr.mxu0 0.0
    %v836 = vand.u32 %v123, 4294901760
    %837 = vmatpush1.xpose.msra.mxu0 %v836
    %838 = vmatprep.subr.mxu0 0.0
    %v839 = vand.u32 %v126, 4294901760
    %840 = vmatpush1.xpose.msra.mxu0 %v839
    %841 = vmatprep.subr.mxu0 0.0
    %v842 = vand.u32 %v129, 4294901760
    %843 = vmatpush1.xpose.msra.mxu0 %v842
    %844 = vmatprep.subr.mxu0 0.0
    %v845 = vand.u32 %v132, 4294901760
    %846 = vmatpush1.xpose.msra.mxu0 %v845
    %847 = vmatprep.subr.mxu0 0.0
    %848 = vmatpush1.xpose.msra.mxu0 0.0
    %849 = vmatprep.subr.mxu0 0.0
    %850 = vmatpush1.xpose.msra.mxu0 0.0
    %851 = vmatprep.subr.mxu0 0.0
    %852 = vmatpush1.xpose.msra.mxu0 0.0
    %853 = vmatprep.subr.mxu0 0.0
    %854 = vmatpush1.xpose.msra.mxu0 0.0
    %855 = vmatprep.subr.mxu0 0.0
    %856 = vmatpush1.xpose.msra.mxu0 0.0
    %857 = vmatprep.subr.mxu0 0.0
    %858 = vmatpush1.xpose.msra.mxu0 0.0
    %859 = vmatprep.subr.mxu0 0.0
    %860 = vmatpush1.xpose.msra.mxu0 0.0
    %861 = vmatprep.subr.mxu0 0.0
    %862 = vmatpush1.xpose.msra.mxu0 0.0
    %863 = vmatprep.subr.mxu0 0.0
    %864 = vmatpush1.xpose.msra.mxu0 0.0
    %865 = vmatprep.subr.mxu0 0.0
    %866 = vmatpush1.xpose.msra.mxu0 0.0
    %867 = vmatprep.subr.mxu0 0.0
    %868 = vmatpush1.xpose.msra.mxu0 0.0
    %869 = vmatprep.subr.mxu0 0.0
    %870 = vmatpush1.xpose.msra.mxu0 0.0
    %871 = vmatprep.subr.mxu0 0.0
    %872 = vmatpush1.xpose.msra.mxu0 0.0
    %873 = vmatprep.subr.mxu0 0.0
    %874 = vmatpush1.xpose.msra.mxu0 0.0
    %875 = vmatprep.subr.mxu0 0.0
    %876 = vmatpush1.xpose.msra.mxu0 0.0
    %877 = vmatprep.subr.mxu0 0.0
    %878 = vmatpush1.xpose.msra.mxu0 0.0
    %879 = vmatprep.mubr.f32.mxu0 0.0
    %v880 = vand.u32 %v75, 4294901760
    %881 = vmatmul.mubr.f32.gmra.mrb[0].mxu0 %v880
    %v882 = vpop.f32.mrb[0].mxu0
    %v883 = vadd.f32 %v778, %v882
    %v884 = vpop.f32.mrb[0].mxu0
    %885 = vmatprep.mubr.f32.mxu0 0.0
    %v886 = vand.u32 %v78, 4294901760
    %887 = vmatmul.mubr.f32.gmra.mrb[0].mxu0 %v886
    %v888 = vpop.f32.mrb[0].mxu0
    %v889 = vadd.f32 %v784, %v888
    %v890 = vpop.f32.mrb[0].mxu0
    %891 = vmatprep.mubr.f32.mxu0 0.0
    %v892 = vand.u32 %v81, 4294901760
    %893 = vmatmul.mubr.f32.gmra.mrb[0].mxu0 %v892
    %v894 = vpop.f32.mrb[0].mxu0
    %v895 = vadd.f32 %v790, %v894
    %v896 = vpop.f32.mrb[0].mxu0
    %897 = vmatprep.mubr.f32.mxu0 0.0
    %v898 = vand.u32 %v84, 4294901760
    %899 = vmatmul.mubr.f32.gmra.mrb[0].mxu0 %v898
    %v900 = vpop.f32.mrb[0].mxu0
    %v901 = vadd.f32 %v796, %v900
    %v902 = vpop.f32.mrb[0].mxu0
    %903 = vdwg.mxu0
    %v904 = vtanh.pop %v883
    %v905 = vtanh.pop %v889
    %v906 = vtanh.pop %v895
    %v907 = vtanh.pop %v901
    %v908 = vld [vmem:[%s3] sm:$0xff]
    %v909 = vld [vmem:[%s3 + $0x8] sm:$0xff]
    %v910 = vld [vmem:[%s3 + $0x10] sm:$0xff]
    %v911 = vld [vmem:[%s3 + $0x18] sm:$0xff]
    %v912 = vld [vmem:[%s4] sm:$0xff]
    %v913 = vld [vmem:[%s4 + $0x8] sm:$0xff]
    %v914 = vld [vmem:[%s4 + $0x10] sm:$0xff]
    %v915 = vld [vmem:[%s4 + $0x18] sm:$0xff]
    %917 = vset.pattern.permute.xlu0 0
    %918 = vperm.xlu0 %917, %v912
    %v919 = vpop.permute.xlu0 %918
    %922 = vset.pattern.permute.xlu0 0
    %923 = vperm.xlu0 %922, %v913
    %v924 = vpop.permute.xlu0 %923
    %927 = vset.pattern.permute.xlu0 0
    %928 = vperm.xlu0 %927, %v914
    %v929 = vpop.permute.xlu0 %928
    %932 = vset.pattern.permute.xlu0 0
    %933 = vperm.xlu0 %932, %v915
    %v934 = vpop.permute.xlu0 %933
    %vm936 = vcmask 261120
    %v938 = vsel %vm936, %v908, 0
    %v941 = vsel %vm936, %v909, 0
    %v944 = vsel %vm936, %v910, 0
    %v947 = vsel %vm936, %v911, 0
    %949 = vmatprep.subr.mxu0 0.0
    %v950 = vand.u32 %v904, 4294901760
    %951 = vmatpush1.msra.mxu0 %v950
    %952 = vmatprep.subr.mxu0 0.0
    %v953 = vand.u32 %v905, 4294901760
    %954 = vmatpush1.msra.mxu0 %v953
    %955 = vmatprep.subr.mxu0 0.0
    %v956 = vand.u32 %v906, 4294901760
    %957 = vmatpush1.msra.mxu0 %v956
    %958 = vmatprep.subr.mxu0 0.0
    %v959 = vand.u32 %v907, 4294901760
    %960 = vmatpush1.msra.mxu0 %v959
    %961 = vmatprep.subr.mxu0 0.0
    %962 = vmatpush1.msra.mxu0 0.0
    %963 = vmatprep.subr.mxu0 0.0
    %964 = vmatpush1.msra.mxu0 0.0
    %965 = vmatprep.subr.mxu0 0.0
    %966 = vmatpush1.msra.mxu0 0.0
    %967 = vmatprep.subr.mxu0 0.0
    %968 = vmatpush1.msra.mxu0 0.0
    %969 = vmatprep.subr.mxu0 0.0
    %970 = vmatpush1.msra.mxu0 0.0
    %971 = vmatprep.subr.mxu0 0.0
    %972 = vmatpush1.msra.mxu0 0.0
    %973 = vmatprep.subr.mxu0 0.0
    %974 = vmatpush1.msra.mxu0 0.0
    %975 = vmatprep.subr.mxu0 0.0
    %976 = vmatpush1.msra.mxu0 0.0
    %977 = vmatprep.subr.mxu0 0.0
    %978 = vmatpush1.msra.mxu0 0.0
    %979 = vmatprep.subr.mxu0 0.0
    %980 = vmatpush1.msra.mxu0 0.0
    %981 = vmatprep.subr.mxu0 0.0
    %982 = vmatpush1.msra.mxu0 0.0
    %983 = vmatprep.subr.mxu0 0.0
    %984 = vmatpush1.msra.mxu0 0.0
    %985 = vmatprep.subr.mxu0 0.0
    %986 = vmatpush1.msra.mxu0 0.0
    %987 = vmatprep.subr.mxu0 0.0
    %988 = vmatpush1.msra.mxu0 0.0
    %989 = vmatprep.subr.mxu0 0.0
    %990 = vmatpush1.msra.mxu0 0.0
    %991 = vmatprep.subr.mxu0 0.0
    %992 = vmatpush1.msra.mxu0 0.0
    %993 = vmatprep.subr.mxu0 0.0
    %994 = vmatpush1.msra.mxu0 0.0
    %995 = vmatprep.subr.mxu0 0.0
    %996 = vmatpush1.msra.mxu0 0.0
    %997 = vmatprep.subr.mxu0 0.0
    %998 = vmatpush1.msra.mxu0 0.0
    %999 = vmatprep.subr.mxu0 0.0
    %1000 = vmatpush1.msra.mxu0 0.0
    %1001 = vmatprep.subr.mxu0 0.0
    %1002 = vmatpush1.msra.mxu0 0.0
    %1003 = vmatprep.subr.mxu0 0.0
    %1004 = vmatpush1.msra.mxu0 0.0
    %1005 = vmatprep.subr.mxu0 0.0
    %1006 = vmatpush1.msra.mxu0 0.0
    %1007 = vmatprep.subr.mxu0 0.0
    %1008 = vmatpush1.msra.mxu0 0.0
    %1009 = vmatprep.subr.mxu0 0.0
    %1010 = vmatpush1.msra.mxu0 0.0
    %1011 = vmatprep.subr.mxu0 0.0
    %1012 = vmatpush1.msra.mxu0 0.0
    %1013 = vmatprep.subr.mxu0 0.0
    %1014 = vmatpush1.msra.mxu0 0.0
    %1015 = vmatprep.subr.mxu0 0.0
    %1016 = vmatpush1.msra.mxu0 0.0
    %1017 = vmatprep.mubr.f32.mxu0 0.0
    %v1018 = vand.u32 %v938, 4294901760
    %v1019 = vsub.f32 %v938, %v1018
    %v1020 = vand.u32 %v1019, 4294901760
    %v1021 = vsub.f32 %v1019, %v1020
    %v1022 = vand.u32 %v1021, 4294901760
    %1023 = vmatmul.mubr.f32.gmra.mrb[0].mxu0 %v1022
    %v1024 = vpop.f32.mrb[0].mxu0
    %v1025 = vadd.f32 %v919, %v1024
    %v1026 = vpop.f32.mrb[0].mxu0
    %1027 = vmatprep.mubr.f32.mxu0 0.0
    %v1028 = vand.u32 %v941, 4294901760
    %v1029 = vsub.f32 %v941, %v1028
    %v1030 = vand.u32 %v1029, 4294901760
    %v1031 = vsub.f32 %v1029, %v1030
    %v1032 = vand.u32 %v1031, 4294901760
    %1033 = vmatmul.mubr.f32.gmra.mrb[0].mxu0 %v1032
    %v1034 = vpop.f32.mrb[0].mxu0
    %v1035 = vadd.f32 %v924, %v1034
    %v1036 = vpop.f32.mrb[0].mxu0
    %1037 = vmatprep.mubr.f32.mxu0 0.0
    %v1038 = vand.u32 %v944, 4294901760
    %v1039 = vsub.f32 %v944, %v1038
    %v1040 = vand.u32 %v1039, 4294901760
    %v1041 = vsub.f32 %v1039, %v1040
    %v1042 = vand.u32 %v1041, 4294901760
    %1043 = vmatmul.mubr.f32.gmra.mrb[0].mxu0 %v1042
    %v1044 = vpop.f32.mrb[0].mxu0
    %v1045 = vadd.f32 %v929, %v1044
    %v1046 = vpop.f32.mrb[0].mxu0
    %1047 = vmatprep.mubr.f32.mxu0 0.0
    %v1048 = vand.u32 %v947, 4294901760
    %v1049 = vsub.f32 %v947, %v1048
    %v1050 = vand.u32 %v1049, 4294901760
    %v1051 = vsub.f32 %v1049, %v1050
    %v1052 = vand.u32 %v1051, 4294901760
    %1053 = vmatmul.mubr.f32.gmra.mrb[0].mxu0 %v1052
    %v1054 = vpop.f32.mrb[0].mxu0
    %v1055 = vadd.f32 %v934, %v1054
    %v1056 = vpop.f32.mrb[0].mxu0
    %1057 = vdwg.mxu0
    %1058 = vmatprep.subr.mxu0 0.0
    %v1059 = vand.u32 %v904, 4294901760
    %v1060 = vsub.f32 %v904, %v1059
    %v1061 = vand.u32 %v1060, 4294901760
    %v1062 = vsub.f32 %v1060, %v1061
    %v1063 = vand.u32 %v1062, 4294901760
    %1064 = vmatpush1.msra.mxu0 %v1063
    %1065 = vmatprep.subr.mxu0 0.0
    %v1066 = vand.u32 %v905, 4294901760
    %v1067 = vsub.f32 %v905, %v1066
    %v1068 = vand.u32 %v1067, 4294901760
    %v1069 = vsub.f32 %v1067, %v1068
    %v1070 = vand.u32 %v1069, 4294901760
    %1071 = vmatpush1.msra.mxu0 %v1070
    %1072 = vmatprep.subr.mxu0 0.0
    %v1073 = vand.u32 %v906, 4294901760
    %v1074 = vsub.f32 %v906, %v1073
    %v1075 = vand.u32 %v1074, 4294901760
    %v1076 = vsub.f32 %v1074, %v1075
    %v1077 = vand.u32 %v1076, 4294901760
    %1078 = vmatpush1.msra.mxu0 %v1077
    %1079 = vmatprep.subr.mxu0 0.0
    %v1080 = vand.u32 %v907, 4294901760
    %v1081 = vsub.f32 %v907, %v1080
    %v1082 = vand.u32 %v1081, 4294901760
    %v1083 = vsub.f32 %v1081, %v1082
    %v1084 = vand.u32 %v1083, 4294901760
    %1085 = vmatpush1.msra.mxu0 %v1084
    %1086 = vmatprep.subr.mxu0 0.0
    %1087 = vmatpush1.msra.mxu0 0.0
    %1088 = vmatprep.subr.mxu0 0.0
    %1089 = vmatpush1.msra.mxu0 0.0
    %1090 = vmatprep.subr.mxu0 0.0
    %1091 = vmatpush1.msra.mxu0 0.0
    %1092 = vmatprep.subr.mxu0 0.0
    %1093 = vmatpush1.msra.mxu0 0.0
    %1094 = vmatprep.subr.mxu0 0.0
    %1095 = vmatpush1.msra.mxu0 0.0
    %1096 = vmatprep.subr.mxu0 0.0
    %1097 = vmatpush1.msra.mxu0 0.0
    %1098 = vmatprep.subr.mxu0 0.0
    %1099 = vmatpush1.msra.mxu0 0.0
    %1100 = vmatprep.subr.mxu0 0.0
    %1101 = vmatpush1.msra.mxu0 0.0
    %1102 = vmatprep.subr.mxu0 0.0
    %1103 = vmatpush1.msra.mxu0 0.0
    %1104 = vmatprep.subr.mxu0 0.0
    %1105 = vmatpush1.msra.mxu0 0.0
    %1106 = vmatprep.subr.mxu0 0.0
    %1107 = vmatpush1.msra.mxu0 0.0
    %1108 = vmatprep.subr.mxu0 0.0
    %1109 = vmatpush1.msra.mxu0 0.0
    %1110 = vmatprep.subr.mxu0 0.0
    %1111 = vmatpush1.msra.mxu0 0.0
    %1112 = vmatprep.subr.mxu0 0.0
    %1113 = vmatpush1.msra.mxu0 0.0
    %1114 = vmatprep.subr.mxu0 0.0
    %1115 = vmatpush1.msra.mxu0 0.0
    %1116 = vmatprep.subr.mxu0 0.0
    %1117 = vmatpush1.msra.mxu0 0.0
    %1118 = vmatprep.subr.mxu0 0.0
    %1119 = vmatpush1.msra.mxu0 0.0
    %1120 = vmatprep.subr.mxu0 0.0
    %1121 = vmatpush1.msra.mxu0 0.0
    %1122 = vmatprep.subr.mxu0 0.0
    %1123 = vmatpush1.msra.mxu0 0.0
    %1124 = vmatprep.subr.mxu0 0.0
    %1125 = vmatpush1.msra.mxu0 0.0
    %1126 = vmatprep.subr.mxu0 0.0
    %1127 = vmatpush1.msra.mxu0 0.0
    %1128 = vmatprep.subr.mxu0 0.0
    %1129 = vmatpush1.msra.mxu0 0.0
    %1130 = vmatprep.subr.mxu0 0.0
    %1131 = vmatpush1.msra.mxu0 0.0
    %1132 = vmatprep.subr.mxu0 0.0
    %1133 = vmatpush1.msra.mxu0 0.0
    %1134 = vmatprep.subr.mxu0 0.0
    %1135 = vmatpush1.msra.mxu0 0.0
    %1136 = vmatprep.subr.mxu0 0.0
    %1137 = vmatpush1.msra.mxu0 0.0
    %1138 = vmatprep.subr.mxu0 0.0
    %1139 = vmatpush1.msra.mxu0 0.0
    %1140 = vmatprep.subr.mxu0 0.0
    %1141 = vmatpush1.msra.mxu0 0.0
    %1142 = vmatprep.mubr.f32.mxu0 0.0
    %v1143 = vand.u32 %v938, 4294901760
    %1144 = vmatmul.mubr.f32.gmra.mrb[0].mxu0 %v1143
    %v1145 = vpop.f32.mrb[0].mxu0
    %v1146 = vadd.f32 %v1025, %v1145
    %v1147 = vpop.f32.mrb[0].mxu0
    %1148 = vmatprep.mubr.f32.mxu0 0.0
    %v1149 = vand.u32 %v941, 4294901760
    %1150 = vmatmul.mubr.f32.gmra.mrb[0].mxu0 %v1149
    %v1151 = vpop.f32.mrb[0].mxu0
    %v1152 = vadd.f32 %v1035, %v1151
    %v1153 = vpop.f32.mrb[0].mxu0
    %1154 = vmatprep.mubr.f32.mxu0 0.0
    %v1155 = vand.u32 %v944, 4294901760
    %1156 = vmatmul.mubr.f32.gmra.mrb[0].mxu0 %v1155
    %v1157 = vpop.f32.mrb[0].mxu0
    %v1158 = vadd.f32 %v1045, %v1157
    %v1159 = vpop.f32.mrb[0].mxu0
    %1160 = vmatprep.mubr.f32.mxu0 0.0
    %v1161 = vand.u32 %v947, 4294901760
    %1162 = vmatmul.mubr.f32.gmra.mrb[0].mxu0 %v1161
    %v1163 = vpop.f32.mrb[0].mxu0
    %v1164 = vadd.f32 %v1055, %v1163
    %v1165 = vpop.f32.mrb[0].mxu0
    %1166 = vdwg.mxu0
    %1167 = vmatprep.subr.mxu0 0.0
    %v1168 = vand.u32 %v904, 4294901760
    %v1169 = vsub.f32 %v904, %v1168
    %1170 = vmatpush1.msra.mxu0 %v1169
    %1171 = vmatprep.subr.mxu0 0.0
    %v1172 = vand.u32 %v905, 4294901760
    %v1173 = vsub.f32 %v905, %v1172
    %1174 = vmatpush1.msra.mxu0 %v1173
    %1175 = vmatprep.subr.mxu0 0.0
    %v1176 = vand.u32 %v906, 4294901760
    %v1177 = vsub.f32 %v906, %v1176
    %1178 = vmatpush1.msra.mxu0 %v1177
    %1179 = vmatprep.subr.mxu0 0.0
    %v1180 = vand.u32 %v907, 4294901760
    %v1181 = vsub.f32 %v907, %v1180
    %1182 = vmatpush1.msra.mxu0 %v1181
    %1183 = vmatprep.subr.mxu0 0.0
    %1184 = vmatpush1.msra.mxu0 0.0
    %1185 = vmatprep.subr.mxu0 0.0
    %1186 = vmatpush1.msra.mxu0 0.0
    %1187 = vmatprep.subr.mxu0 0.0
    %1188 = vmatpush1.msra.mxu0 0.0
    %1189 = vmatprep.subr.mxu0 0.0
    %1190 = vmatpush1.msra.mxu0 0.0
    %1191 = vmatprep.subr.mxu0 0.0
    %1192 = vmatpush1.msra.mxu0 0.0
    %1193 = vmatprep.subr.mxu0 0.0
    %1194 = vmatpush1.msra.mxu0 0.0
    %1195 = vmatprep.subr.mxu0 0.0
    %1196 = vmatpush1.msra.mxu0 0.0
    %1197 = vmatprep.subr.mxu0 0.0
    %1198 = vmatpush1.msra.mxu0 0.0
    %1199 = vmatprep.subr.mxu0 0.0
    %1200 = vmatpush1.msra.mxu0 0.0
    %1201 = vmatprep.subr.mxu0 0.0
    %1202 = vmatpush1.msra.mxu0 0.0
    %1203 = vmatprep.subr.mxu0 0.0
    %1204 = vmatpush1.msra.mxu0 0.0
    %1205 = vmatprep.subr.mxu0 0.0
    %1206 = vmatpush1.msra.mxu0 0.0
    %1207 = vmatprep.subr.mxu0 0.0
    %1208 = vmatpush1.msra.mxu0 0.0
    %1209 = vmatprep.subr.mxu0 0.0
    %1210 = vmatpush1.msra.mxu0 0.0
    %1211 = vmatprep.subr.mxu0 0.0
    %1212 = vmatpush1.msra.mxu0 0.0
    %1213 = vmatprep.subr.mxu0 0.0
    %1214 = vmatpush1.msra.mxu0 0.0
    %1215 = vmatprep.subr.mxu0 0.0
    %1216 = vmatpush1.msra.mxu0 0.0
    %1217 = vmatprep.subr.mxu0 0.0
    %1218 = vmatpush1.msra.mxu0 0.0
    %1219 = vmatprep.subr.mxu0 0.0
    %1220 = vmatpush1.msra.mxu0 0.0
    %1221 = vmatprep.subr.mxu0 0.0
    %1222 = vmatpush1.msra.mxu0 0.0
    %1223 = vmatprep.subr.mxu0 0.0
    %1224 = vmatpush1.msra.mxu0 0.0
    %1225 = vmatprep.subr.mxu0 0.0
    %1226 = vmatpush1.msra.mxu0 0.0
    %1227 = vmatprep.subr.mxu0 0.0
    %1228 = vmatpush1.msra.mxu0 0.0
    %1229 = vmatprep.subr.mxu0 0.0
    %1230 = vmatpush1.msra.mxu0 0.0
    %1231 = vmatprep.subr.mxu0 0.0
    %1232 = vmatpush1.msra.mxu0 0.0
    %1233 = vmatprep.subr.mxu0 0.0
    %1234 = vmatpush1.msra.mxu0 0.0
    %1235 = vmatprep.subr.mxu0 0.0
    %1236 = vmatpush1.msra.mxu0 0.0
    %1237 = vmatprep.subr.mxu0 0.0
    %1238 = vmatpush1.msra.mxu0 0.0
    %1239 = vmatprep.mubr.f32.mxu0 0.0
    %v1240 = vand.u32 %v938, 4294901760
    %v1241 = vsub.f32 %v938, %v1240
    %1242 = vmatmul.mubr.f32.gmra.mrb[0].mxu0 %v1241
    %v1243 = vpop.f32.mrb[0].mxu0
    %v1244 = vadd.f32 %v1146, %v1243
    %v1245 = vpop.f32.mrb[0].mxu0
    %1246 = vmatprep.mubr.f32.mxu0 0.0
    %v1247 = vand.u32 %v941, 4294901760
    %v1248 = vsub.f32 %v941, %v1247
    %1249 = vmatmul.mubr.f32.gmra.mrb[0].mxu0 %v1248
    %v1250 = vpop.f32.mrb[0].mxu0
    %v1251 = vadd.f32 %v1152, %v1250
    %v1252 = vpop.f32.mrb[0].mxu0
    %1253 = vmatprep.mubr.f32.mxu0 0.0
    %v1254 = vand.u32 %v944, 4294901760
    %v1255 = vsub.f32 %v944, %v1254
    %1256 = vmatmul.mubr.f32.gmra.mrb[0].mxu0 %v1255
    %v1257 = vpop.f32.mrb[0].mxu0
    %v1258 = vadd.f32 %v1158, %v1257
    %v1259 = vpop.f32.mrb[0].mxu0
    %1260 = vmatprep.mubr.f32.mxu0 0.0
    %v1261 = vand.u32 %v947, 4294901760
    %v1262 = vsub.f32 %v947, %v1261
    %1263 = vmatmul.mubr.f32.gmra.mrb[0].mxu0 %v1262
    %v1264 = vpop.f32.mrb[0].mxu0
    %v1265 = vadd.f32 %v1164, %v1264
    %v1266 = vpop.f32.mrb[0].mxu0
    %1267 = vdwg.mxu0
    %1268 = vmatprep.subr.mxu0 0.0
    %v1269 = vand.u32 %v904, 4294901760
    %1270 = vmatpush1.msra.mxu0 %v1269
    %1271 = vmatprep.subr.mxu0 0.0
    %v1272 = vand.u32 %v905, 4294901760
    %1273 = vmatpush1.msra.mxu0 %v1272
    %1274 = vmatprep.subr.mxu0 0.0
    %v1275 = vand.u32 %v906, 4294901760
    %1276 = vmatpush1.msra.mxu0 %v1275
    %1277 = vmatprep.subr.mxu0 0.0
    %v1278 = vand.u32 %v907, 4294901760
    %1279 = vmatpush1.msra.mxu0 %v1278
    %1280 = vmatprep.subr.mxu0 0.0
    %1281 = vmatpush1.msra.mxu0 0.0
    %1282 = vmatprep.subr.mxu0 0.0
    %1283 = vmatpush1.msra.mxu0 0.0
    %1284 = vmatprep.subr.mxu0 0.0
    %1285 = vmatpush1.msra.mxu0 0.0
    %1286 = vmatprep.subr.mxu0 0.0
    %1287 = vmatpush1.msra.mxu0 0.0
    %1288 = vmatprep.subr.mxu0 0.0
    %1289 = vmatpush1.msra.mxu0 0.0
    %1290 = vmatprep.subr.mxu0 0.0
    %1291 = vmatpush1.msra.mxu0 0.0
    %1292 = vmatprep.subr.mxu0 0.0
    %1293 = vmatpush1.msra.mxu0 0.0
    %1294 = vmatprep.subr.mxu0 0.0
    %1295 = vmatpush1.msra.mxu0 0.0
    %1296 = vmatprep.subr.mxu0 0.0
    %1297 = vmatpush1.msra.mxu0 0.0
    %1298 = vmatprep.subr.mxu0 0.0
    %1299 = vmatpush1.msra.mxu0 0.0
    %1300 = vmatprep.subr.mxu0 0.0
    %1301 = vmatpush1.msra.mxu0 0.0
    %1302 = vmatprep.subr.mxu0 0.0
    %1303 = vmatpush1.msra.mxu0 0.0
    %1304 = vmatprep.subr.mxu0 0.0
    %1305 = vmatpush1.msra.mxu0 0.0
    %1306 = vmatprep.subr.mxu0 0.0
    %1307 = vmatpush1.msra.mxu0 0.0
    %1308 = vmatprep.subr.mxu0 0.0
    %1309 = vmatpush1.msra.mxu0 0.0
    %1310 = vmatprep.subr.mxu0 0.0
    %1311 = vmatpush1.msra.mxu0 0.0
    %1312 = vmatprep.subr.mxu0 0.0
    %1313 = vmatpush1.msra.mxu0 0.0
    %1314 = vmatprep.subr.mxu0 0.0
    %1315 = vmatpush1.msra.mxu0 0.0
    %1316 = vmatprep.subr.mxu0 0.0
    %1317 = vmatpush1.msra.mxu0 0.0
    %1318 = vmatprep.subr.mxu0 0.0
    %1319 = vmatpush1.msra.mxu0 0.0
    %1320 = vmatprep.subr.mxu0 0.0
    %1321 = vmatpush1.msra.mxu0 0.0
    %1322 = vmatprep.subr.mxu0 0.0
    %1323 = vmatpush1.msra.mxu0 0.0
    %1324 = vmatprep.subr.mxu0 0.0
    %1325 = vmatpush1.msra.mxu0 0.0
    %1326 = vmatprep.subr.mxu0 0.0
    %1327 = vmatpush1.msra.mxu0 0.0
    %1328 = vmatprep.subr.mxu0 0.0
    %1329 = vmatpush1.msra.mxu0 0.0
    %1330 = vmatprep.subr.mxu0 0.0
    %1331 = vmatpush1.msra.mxu0 0.0
    %1332 = vmatprep.subr.mxu0 0.0
    %1333 = vmatpush1.msra.mxu0 0.0
    %1334 = vmatprep.subr.mxu0 0.0
    %1335 = vmatpush1.msra.mxu0 0.0
    %1336 = vmatprep.mubr.f32.mxu0 0.0
    %v1337 = vand.u32 %v938, 4294901760
    %v1338 = vsub.f32 %v938, %v1337
    %v1339 = vand.u32 %v1338, 4294901760
    %1340 = vmatmul.mubr.f32.gmra.mrb[0].mxu0 %v1339
    %v1341 = vpop.f32.mrb[0].mxu0
    %v1342 = vadd.f32 %v1244, %v1341
    %v1343 = vpop.f32.mrb[0].mxu0
    %1344 = vmatprep.mubr.f32.mxu0 0.0
    %v1345 = vand.u32 %v941, 4294901760
    %v1346 = vsub.f32 %v941, %v1345
    %v1347 = vand.u32 %v1346, 4294901760
    %1348 = vmatmul.mubr.f32.gmra.mrb[0].mxu0 %v1347
    %v1349 = vpop.f32.mrb[0].mxu0
    %v1350 = vadd.f32 %v1251, %v1349
    %v1351 = vpop.f32.mrb[0].mxu0
    %1352 = vmatprep.mubr.f32.mxu0 0.0
    %v1353 = vand.u32 %v944, 4294901760
    %v1354 = vsub.f32 %v944, %v1353
    %v1355 = vand.u32 %v1354, 4294901760
    %1356 = vmatmul.mubr.f32.gmra.mrb[0].mxu0 %v1355
    %v1357 = vpop.f32.mrb[0].mxu0
    %v1358 = vadd.f32 %v1258, %v1357
    %v1359 = vpop.f32.mrb[0].mxu0
    %1360 = vmatprep.mubr.f32.mxu0 0.0
    %v1361 = vand.u32 %v947, 4294901760
    %v1362 = vsub.f32 %v947, %v1361
    %v1363 = vand.u32 %v1362, 4294901760
    %1364 = vmatmul.mubr.f32.gmra.mrb[0].mxu0 %v1363
    %v1365 = vpop.f32.mrb[0].mxu0
    %v1366 = vadd.f32 %v1265, %v1365
    %v1367 = vpop.f32.mrb[0].mxu0
    %1368 = vdwg.mxu0
    %1369 = vmatprep.subr.mxu0 0.0
    %v1370 = vand.u32 %v904, 4294901760
    %v1371 = vsub.f32 %v904, %v1370
    %v1372 = vand.u32 %v1371, 4294901760
    %1373 = vmatpush1.msra.mxu0 %v1372
    %1374 = vmatprep.subr.mxu0 0.0
    %v1375 = vand.u32 %v905, 4294901760
    %v1376 = vsub.f32 %v905, %v1375
    %v1377 = vand.u32 %v1376, 4294901760
    %1378 = vmatpush1.msra.mxu0 %v1377
    %1379 = vmatprep.subr.mxu0 0.0
    %v1380 = vand.u32 %v906, 4294901760
    %v1381 = vsub.f32 %v906, %v1380
    %v1382 = vand.u32 %v1381, 4294901760
    %1383 = vmatpush1.msra.mxu0 %v1382
    %1384 = vmatprep.subr.mxu0 0.0
    %v1385 = vand.u32 %v907, 4294901760
    %v1386 = vsub.f32 %v907, %v1385
    %v1387 = vand.u32 %v1386, 4294901760
    %1388 = vmatpush1.msra.mxu0 %v1387
    %1389 = vmatprep.subr.mxu0 0.0
    %1390 = vmatpush1.msra.mxu0 0.0
    %1391 = vmatprep.subr.mxu0 0.0
    %1392 = vmatpush1.msra.mxu0 0.0
    %1393 = vmatprep.subr.mxu0 0.0
    %1394 = vmatpush1.msra.mxu0 0.0
    %1395 = vmatprep.subr.mxu0 0.0
    %1396 = vmatpush1.msra.mxu0 0.0
    %1397 = vmatprep.subr.mxu0 0.0
    %1398 = vmatpush1.msra.mxu0 0.0
    %1399 = vmatprep.subr.mxu0 0.0
    %1400 = vmatpush1.msra.mxu0 0.0
    %1401 = vmatprep.subr.mxu0 0.0
    %1402 = vmatpush1.msra.mxu0 0.0
    %1403 = vmatprep.subr.mxu0 0.0
    %1404 = vmatpush1.msra.mxu0 0.0
    %1405 = vmatprep.subr.mxu0 0.0
    %1406 = vmatpush1.msra.mxu0 0.0
    %1407 = vmatprep.subr.mxu0 0.0
    %1408 = vmatpush1.msra.mxu0 0.0
    %1409 = vmatprep.subr.mxu0 0.0
    %1410 = vmatpush1.msra.mxu0 0.0
    %1411 = vmatprep.subr.mxu0 0.0
    %1412 = vmatpush1.msra.mxu0 0.0
    %1413 = vmatprep.subr.mxu0 0.0
    %1414 = vmatpush1.msra.mxu0 0.0
    %1415 = vmatprep.subr.mxu0 0.0
    %1416 = vmatpush1.msra.mxu0 0.0
    %1417 = vmatprep.subr.mxu0 0.0
    %1418 = vmatpush1.msra.mxu0 0.0
    %1419 = vmatprep.subr.mxu0 0.0
    %1420 = vmatpush1.msra.mxu0 0.0
    %1421 = vmatprep.subr.mxu0 0.0
    %1422 = vmatpush1.msra.mxu0 0.0
    %1423 = vmatprep.subr.mxu0 0.0
    %1424 = vmatpush1.msra.mxu0 0.0
    %1425 = vmatprep.subr.mxu0 0.0
    %1426 = vmatpush1.msra.mxu0 0.0
    %1427 = vmatprep.subr.mxu0 0.0
    %1428 = vmatpush1.msra.mxu0 0.0
    %1429 = vmatprep.subr.mxu0 0.0
    %1430 = vmatpush1.msra.mxu0 0.0
    %1431 = vmatprep.subr.mxu0 0.0
    %1432 = vmatpush1.msra.mxu0 0.0
    %1433 = vmatprep.subr.mxu0 0.0
    %1434 = vmatpush1.msra.mxu0 0.0
    %1435 = vmatprep.subr.mxu0 0.0
    %1436 = vmatpush1.msra.mxu0 0.0
    %1437 = vmatprep.subr.mxu0 0.0
    %1438 = vmatpush1.msra.mxu0 0.0
    %1439 = vmatprep.subr.mxu0 0.0
    %1440 = vmatpush1.msra.mxu0 0.0
    %1441 = vmatprep.subr.mxu0 0.0
    %1442 = vmatpush1.msra.mxu0 0.0
    %1443 = vmatprep.subr.mxu0 0.0
    %1444 = vmatpush1.msra.mxu0 0.0
    %1445 = vmatprep.mubr.f32.mxu0 0.0
    %v1446 = vand.u32 %v938, 4294901760
    %1447 = vmatmul.mubr.f32.gmra.mrb[0].mxu0 %v1446
    %v1448 = vpop.f32.mrb[0].mxu0
    %v1449 = vadd.f32 %v1342, %v1448
    %v1450 = vpop.f32.mrb[0].mxu0
    %1451 = vmatprep.mubr.f32.mxu0 0.0
    %v1452 = vand.u32 %v941, 4294901760
    %1453 = vmatmul.mubr.f32.gmra.mrb[0].mxu0 %v1452
    %v1454 = vpop.f32.mrb[0].mxu0
    %v1455 = vadd.f32 %v1350, %v1454
    %v1456 = vpop.f32.mrb[0].mxu0
    %1457 = vmatprep.mubr.f32.mxu0 0.0
    %v1458 = vand.u32 %v944, 4294901760
    %1459 = vmatmul.mubr.f32.gmra.mrb[0].mxu0 %v1458
    %v1460 = vpop.f32.mrb[0].mxu0
    %v1461 = vadd.f32 %v1358, %v1460
    %v1462 = vpop.f32.mrb[0].mxu0
    %1463 = vmatprep.mubr.f32.mxu0 0.0
    %v1464 = vand.u32 %v947, 4294901760
    %1465 = vmatmul.mubr.f32.gmra.mrb[0].mxu0 %v1464
    %v1466 = vpop.f32.mrb[0].mxu0
    %v1467 = vadd.f32 %v1366, %v1466
    %v1468 = vpop.f32.mrb[0].mxu0
    %1469 = vdwg.mxu0
    %1470 = vmatprep.subr.mxu0 0.0
    %v1471 = vand.u32 %v904, 4294901760
    %1472 = vmatpush1.msra.mxu0 %v1471
    %1473 = vmatprep.subr.mxu0 0.0
    %v1474 = vand.u32 %v905, 4294901760
    %1475 = vmatpush1.msra.mxu0 %v1474
    %1476 = vmatprep.subr.mxu0 0.0
    %v1477 = vand.u32 %v906, 4294901760
    %1478 = vmatpush1.msra.mxu0 %v1477
    %1479 = vmatprep.subr.mxu0 0.0
    %v1480 = vand.u32 %v907, 4294901760
    %1481 = vmatpush1.msra.mxu0 %v1480
    %1482 = vmatprep.subr.mxu0 0.0
    %1483 = vmatpush1.msra.mxu0 0.0
    %1484 = vmatprep.subr.mxu0 0.0
    %1485 = vmatpush1.msra.mxu0 0.0
    %1486 = vmatprep.subr.mxu0 0.0
    %1487 = vmatpush1.msra.mxu0 0.0
    %1488 = vmatprep.subr.mxu0 0.0
    %1489 = vmatpush1.msra.mxu0 0.0
    %1490 = vmatprep.subr.mxu0 0.0
    %1491 = vmatpush1.msra.mxu0 0.0
    %1492 = vmatprep.subr.mxu0 0.0
    %1493 = vmatpush1.msra.mxu0 0.0
    %1494 = vmatprep.subr.mxu0 0.0
    %1495 = vmatpush1.msra.mxu0 0.0
    %1496 = vmatprep.subr.mxu0 0.0
    %1497 = vmatpush1.msra.mxu0 0.0
    %1498 = vmatprep.subr.mxu0 0.0
    %1499 = vmatpush1.msra.mxu0 0.0
    %1500 = vmatprep.subr.mxu0 0.0
    %1501 = vmatpush1.msra.mxu0 0.0
    %1502 = vmatprep.subr.mxu0 0.0
    %1503 = vmatpush1.msra.mxu0 0.0
    %1504 = vmatprep.subr.mxu0 0.0
    %1505 = vmatpush1.msra.mxu0 0.0
    %1506 = vmatprep.subr.mxu0 0.0
    %1507 = vmatpush1.msra.mxu0 0.0
    %1508 = vmatprep.subr.mxu0 0.0
    %1509 = vmatpush1.msra.mxu0 0.0
    %1510 = vmatprep.subr.mxu0 0.0
    %1511 = vmatpush1.msra.mxu0 0.0
    %1512 = vmatprep.subr.mxu0 0.0
    %1513 = vmatpush1.msra.mxu0 0.0
    %1514 = vmatprep.subr.mxu0 0.0
    %1515 = vmatpush1.msra.mxu0 0.0
    %1516 = vmatprep.subr.mxu0 0.0
    %1517 = vmatpush1.msra.mxu0 0.0
    %1518 = vmatprep.subr.mxu0 0.0
    %1519 = vmatpush1.msra.mxu0 0.0
    %1520 = vmatprep.subr.mxu0 0.0
    %1521 = vmatpush1.msra.mxu0 0.0
    %1522 = vmatprep.subr.mxu0 0.0
    %1523 = vmatpush1.msra.mxu0 0.0
    %1524 = vmatprep.subr.mxu0 0.0
    %1525 = vmatpush1.msra.mxu0 0.0
    %1526 = vmatprep.subr.mxu0 0.0
    %1527 = vmatpush1.msra.mxu0 0.0
    %1528 = vmatprep.subr.mxu0 0.0
    %1529 = vmatpush1.msra.mxu0 0.0
    %1530 = vmatprep.subr.mxu0 0.0
    %1531 = vmatpush1.msra.mxu0 0.0
    %1532 = vmatprep.subr.mxu0 0.0
    %1533 = vmatpush1.msra.mxu0 0.0
    %1534 = vmatprep.subr.mxu0 0.0
    %1535 = vmatpush1.msra.mxu0 0.0
    %1536 = vmatprep.subr.mxu0 0.0
    %1537 = vmatpush1.msra.mxu0 0.0
    %1538 = vmatprep.mubr.f32.mxu0 0.0
    %v1539 = vand.u32 %v938, 4294901760
    %1540 = vmatmul.mubr.f32.gmra.mrb[0].mxu0 %v1539
    %v1541 = vpop.f32.mrb[0].mxu0
    %v1542 = vadd.f32 %v1449, %v1541
    %v1543 = vpop.f32.mrb[0].mxu0
    %1544 = vmatprep.mubr.f32.mxu0 0.0
    %v1545 = vand.u32 %v941, 4294901760
    %1546 = vmatmul.mubr.f32.gmra.mrb[0].mxu0 %v1545
    %v1547 = vpop.f32.mrb[0].mxu0
    %v1548 = vadd.f32 %v1455, %v1547
    %v1549 = vpop.f32.mrb[0].mxu0
    %1550 = vmatprep.mubr.f32.mxu0 0.0
    %v1551 = vand.u32 %v944, 4294901760
    %1552 = vmatmul.mubr.f32.gmra.mrb[0].mxu0 %v1551
    %v1553 = vpop.f32.mrb[0].mxu0
    %v1554 = vadd.f32 %v1461, %v1553
    %v1555 = vpop.f32.mrb[0].mxu0
    %1556 = vmatprep.mubr.f32.mxu0 0.0
    %v1557 = vand.u32 %v947, 4294901760
    %1558 = vmatmul.mubr.f32.gmra.mrb[0].mxu0 %v1557
    %v1559 = vpop.f32.mrb[0].mxu0
    %v1560 = vadd.f32 %v1467, %v1559
    %v1561 = vpop.f32.mrb[0].mxu0
    %1562 = vdwg.mxu0
    %v1563 = vtanh.pop %v1542
    %v1564 = vtanh.pop %v1548
    %v1565 = vtanh.pop %v1554
    %v1566 = vtanh.pop %v1560
    %v1567 = vld [vmem:[%s5] sm:$0x1]
    %v1568 = vld [vmem:[#allocation2] sm:$0x1]
    %1570 = vset.pattern.permute.xlu0 0
    %1571 = vperm.xlu0 %1570, %v1568
    %v1572 = vpop.permute.xlu0 %1571
    %v1574 = vlaneseq
    %v1575 = vshrl.u32 %v1574, 7
    %v1576 = vsub.s32 0, %v1575
    %v1577 = vrot.slane %v1572, %v1576
    %v1579 = vsel %vm936, %v1567, 0
    %1581 = vmatprep.subr.mxu0 0.0
    %v1582 = vand.u32 %v1563, 4294901760
    %1583 = vmatpush1.msra.mxu0 %v1582
    %1584 = vmatprep.subr.mxu0 0.0
    %v1585 = vand.u32 %v1564, 4294901760
    %1586 = vmatpush1.msra.mxu0 %v1585
    %1587 = vmatprep.subr.mxu0 0.0
    %v1588 = vand.u32 %v1565, 4294901760
    %1589 = vmatpush1.msra.mxu0 %v1588
    %1590 = vmatprep.subr.mxu0 0.0
    %v1591 = vand.u32 %v1566, 4294901760
    %1592 = vmatpush1.msra.mxu0 %v1591
    %1593 = vmatprep.subr.mxu0 0.0
    %1594 = vmatpush1.msra.mxu0 0.0
    %1595 = vmatprep.subr.mxu0 0.0
    %1596 = vmatpush1.msra.mxu0 0.0
    %1597 = vmatprep.subr.mxu0 0.0
    %1598 = vmatpush1.msra.mxu0 0.0
    %1599 = vmatprep.subr.mxu0 0.0
    %1600 = vmatpush1.msra.mxu0 0.0
    %1601 = vmatprep.subr.mxu0 0.0
    %1602 = vmatpush1.msra.mxu0 0.0
    %1603 = vmatprep.subr.mxu0 0.0
    %1604 = vmatpush1.msra.mxu0 0.0
    %1605 = vmatprep.subr.mxu0 0.0
    %1606 = vmatpush1.msra.mxu0 0.0
    %1607 = vmatprep.subr.mxu0 0.0
    %1608 = vmatpush1.msra.mxu0 0.0
    %1609 = vmatprep.subr.mxu0 0.0
    %1610 = vmatpush1.msra.mxu0 0.0
    %1611 = vmatprep.subr.mxu0 0.0
    %1612 = vmatpush1.msra.mxu0 0.0
    %1613 = vmatprep.subr.mxu0 0.0
    %1614 = vmatpush1.msra.mxu0 0.0
    %1615 = vmatprep.subr.mxu0 0.0
    %1616 = vmatpush1.msra.mxu0 0.0
    %1617 = vmatprep.subr.mxu0 0.0
    %1618 = vmatpush1.msra.mxu0 0.0
    %1619 = vmatprep.subr.mxu0 0.0
    %1620 = vmatpush1.msra.mxu0 0.0
    %1621 = vmatprep.subr.mxu0 0.0
    %1622 = vmatpush1.msra.mxu0 0.0
    %1623 = vmatprep.subr.mxu0 0.0
    %1624 = vmatpush1.msra.mxu0 0.0
    %1625 = vmatprep.subr.mxu0 0.0
    %1626 = vmatpush1.msra.mxu0 0.0
    %1627 = vmatprep.subr.mxu0 0.0
    %1628 = vmatpush1.msra.mxu0 0.0
    %1629 = vmatprep.subr.mxu0 0.0
    %1630 = vmatpush1.msra.mxu0 0.0
    %1631 = vmatprep.subr.mxu0 0.0
    %1632 = vmatpush1.msra.mxu0 0.0
    %1633 = vmatprep.subr.mxu0 0.0
    %1634 = vmatpush1.msra.mxu0 0.0
    %1635 = vmatprep.subr.mxu0 0.0
    %1636 = vmatpush1.msra.mxu0 0.0
    %1637 = vmatprep.subr.mxu0 0.0
    %1638 = vmatpush1.msra.mxu0 0.0
    %1639 = vmatprep.subr.mxu0 0.0
    %1640 = vmatpush1.msra.mxu0 0.0
    %1641 = vmatprep.subr.mxu0 0.0
    %1642 = vmatpush1.msra.mxu0 0.0
    %1643 = vmatprep.subr.mxu0 0.0
    %1644 = vmatpush1.msra.mxu0 0.0
    %1645 = vmatprep.subr.mxu0 0.0
    %1646 = vmatpush1.msra.mxu0 0.0
    %1647 = vmatprep.subr.mxu0 0.0
    %1648 = vmatpush1.msra.mxu0 0.0
    %1649 = vmatprep.mubr.f32.mxu0 0.0
    %v1650 = vand.u32 %v1579, 4294901760
    %v1651 = vsub.f32 %v1579, %v1650
    %v1652 = vand.u32 %v1651, 4294901760
    %v1653 = vsub.f32 %v1651, %v1652
    %v1654 = vand.u32 %v1653, 4294901760
    %1655 = vmatmul.mubr.f32.gmra.mrb[0].mxu0 %v1654
    %v1656 = vpop.f32.mrb[0].mxu0
    %v1657 = vadd.f32 %v1577, %v1656
    %v1658 = vpop.f32.mrb[0].mxu0
    %1659 = vdwg.mxu0
    %1660 = vmatprep.subr.mxu0 0.0
    %v1661 = vand.u32 %v1563, 4294901760
    %v1662 = vsub.f32 %v1563, %v1661
    %v1663 = vand.u32 %v1662, 4294901760
    %v1664 = vsub.f32 %v1662, %v1663
    %v1665 = vand.u32 %v1664, 4294901760
    %1666 = vmatpush1.msra.mxu0 %v1665
    %1667 = vmatprep.subr.mxu0 0.0
    %v1668 = vand.u32 %v1564, 4294901760
    %v1669 = vsub.f32 %v1564, %v1668
    %v1670 = vand.u32 %v1669, 4294901760
    %v1671 = vsub.f32 %v1669, %v1670
    %v1672 = vand.u32 %v1671, 4294901760
    %1673 = vmatpush1.msra.mxu0 %v1672
    %1674 = vmatprep.subr.mxu0 0.0
    %v1675 = vand.u32 %v1565, 4294901760
    %v1676 = vsub.f32 %v1565, %v1675
    %v1677 = vand.u32 %v1676, 4294901760
    %v1678 = vsub.f32 %v1676, %v1677
    %v1679 = vand.u32 %v1678, 4294901760
    %1680 = vmatpush1.msra.mxu0 %v1679
    %1681 = vmatprep.subr.mxu0 0.0
    %v1682 = vand.u32 %v1566, 4294901760
    %v1683 = vsub.f32 %v1566, %v1682
    %v1684 = vand.u32 %v1683, 4294901760
    %v1685 = vsub.f32 %v1683, %v1684
    %v1686 = vand.u32 %v1685, 4294901760
    %1687 = vmatpush1.msra.mxu0 %v1686
    %1688 = vmatprep.subr.mxu0 0.0
    %1689 = vmatpush1.msra.mxu0 0.0
    %1690 = vmatprep.subr.mxu0 0.0
    %1691 = vmatpush1.msra.mxu0 0.0
    %1692 = vmatprep.subr.mxu0 0.0
    %1693 = vmatpush1.msra.mxu0 0.0
    %1694 = vmatprep.subr.mxu0 0.0
    %1695 = vmatpush1.msra.mxu0 0.0
    %1696 = vmatprep.subr.mxu0 0.0
    %1697 = vmatpush1.msra.mxu0 0.0
    %1698 = vmatprep.subr.mxu0 0.0
    %1699 = vmatpush1.msra.mxu0 0.0
    %1700 = vmatprep.subr.mxu0 0.0
    %1701 = vmatpush1.msra.mxu0 0.0
    %1702 = vmatprep.subr.mxu0 0.0
    %1703 = vmatpush1.msra.mxu0 0.0
    %1704 = vmatprep.subr.mxu0 0.0
    %1705 = vmatpush1.msra.mxu0 0.0
    %1706 = vmatprep.subr.mxu0 0.0
    %1707 = vmatpush1.msra.mxu0 0.0
    %1708 = vmatprep.subr.mxu0 0.0
    %1709 = vmatpush1.msra.mxu0 0.0
    %1710 = vmatprep.subr.mxu0 0.0
    %1711 = vmatpush1.msra.mxu0 0.0
    %1712 = vmatprep.subr.mxu0 0.0
    %1713 = vmatpush1.msra.mxu0 0.0
    %1714 = vmatprep.subr.mxu0 0.0
    %1715 = vmatpush1.msra.mxu0 0.0
    %1716 = vmatprep.subr.mxu0 0.0
    %1717 = vmatpush1.msra.mxu0 0.0
    %1718 = vmatprep.subr.mxu0 0.0
    %1719 = vmatpush1.msra.mxu0 0.0
    %1720 = vmatprep.subr.mxu0 0.0
    %1721 = vmatpush1.msra.mxu0 0.0
    %1722 = vmatprep.subr.mxu0 0.0
    %1723 = vmatpush1.msra.mxu0 0.0
    %1724 = vmatprep.subr.mxu0 0.0
    %1725 = vmatpush1.msra.mxu0 0.0
    %1726 = vmatprep.subr.mxu0 0.0
    %1727 = vmatpush1.msra.mxu0 0.0
    %1728 = vmatprep.subr.mxu0 0.0
    %1729 = vmatpush1.msra.mxu0 0.0
    %1730 = vmatprep.subr.mxu0 0.0
    %1731 = vmatpush1.msra.mxu0 0.0
    %1732 = vmatprep.subr.mxu0 0.0
    %1733 = vmatpush1.msra.mxu0 0.0
    %1734 = vmatprep.subr.mxu0 0.0
    %1735 = vmatpush1.msra.mxu0 0.0
    %1736 = vmatprep.subr.mxu0 0.0
    %1737 = vmatpush1.msra.mxu0 0.0
    %1738 = vmatprep.subr.mxu0 0.0
    %1739 = vmatpush1.msra.mxu0 0.0
    %1740 = vmatprep.subr.mxu0 0.0
    %1741 = vmatpush1.msra.mxu0 0.0
    %1742 = vmatprep.subr.mxu0 0.0
    %1743 = vmatpush1.msra.mxu0 0.0
    %1744 = vmatprep.mubr.f32.mxu0 0.0
    %v1745 = vand.u32 %v1579, 4294901760
    %1746 = vmatmul.mubr.f32.gmra.mrb[0].mxu0 %v1745
    %v1747 = vpop.f32.mrb[0].mxu0
    %v1748 = vadd.f32 %v1657, %v1747
    %v1749 = vpop.f32.mrb[0].mxu0
    %1750 = vdwg.mxu0
    %1751 = vmatprep.subr.mxu0 0.0
    %v1752 = vand.u32 %v1563, 4294901760
    %v1753 = vsub.f32 %v1563, %v1752
    %1754 = vmatpush1.msra.mxu0 %v1753
    %1755 = vmatprep.subr.mxu0 0.0
    %v1756 = vand.u32 %v1564, 4294901760
    %v1757 = vsub.f32 %v1564, %v1756
    %1758 = vmatpush1.msra.mxu0 %v1757
    %1759 = vmatprep.subr.mxu0 0.0
    %v1760 = vand.u32 %v1565, 4294901760
    %v1761 = vsub.f32 %v1565, %v1760
    %1762 = vmatpush1.msra.mxu0 %v1761
    %1763 = vmatprep.subr.mxu0 0.0
    %v1764 = vand.u32 %v1566, 4294901760
    %v1765 = vsub.f32 %v1566, %v1764
    %1766 = vmatpush1.msra.mxu0 %v1765
    %1767 = vmatprep.subr.mxu0 0.0
    %1768 = vmatpush1.msra.mxu0 0.0
    %1769 = vmatprep.subr.mxu0 0.0
    %1770 = vmatpush1.msra.mxu0 0.0
    %1771 = vmatprep.subr.mxu0 0.0
    %1772 = vmatpush1.msra.mxu0 0.0
    %1773 = vmatprep.subr.mxu0 0.0
    %1774 = vmatpush1.msra.mxu0 0.0
    %1775 = vmatprep.subr.mxu0 0.0
    %1776 = vmatpush1.msra.mxu0 0.0
    %1777 = vmatprep.subr.mxu0 0.0
    %1778 = vmatpush1.msra.mxu0 0.0
    %1779 = vmatprep.subr.mxu0 0.0
    %1780 = vmatpush1.msra.mxu0 0.0
    %1781 = vmatprep.subr.mxu0 0.0
    %1782 = vmatpush1.msra.mxu0 0.0
    %1783 = vmatprep.subr.mxu0 0.0
    %1784 = vmatpush1.msra.mxu0 0.0
    %1785 = vmatprep.subr.mxu0 0.0
    %1786 = vmatpush1.msra.mxu0 0.0
    %1787 = vmatprep.subr.mxu0 0.0
    %1788 = vmatpush1.msra.mxu0 0.0
    %1789 = vmatprep.subr.mxu0 0.0
    %1790 = vmatpush1.msra.mxu0 0.0
    %1791 = vmatprep.subr.mxu0 0.0
    %1792 = vmatpush1.msra.mxu0 0.0
    %1793 = vmatprep.subr.mxu0 0.0
    %1794 = vmatpush1.msra.mxu0 0.0
    %1795 = vmatprep.subr.mxu0 0.0
    %1796 = vmatpush1.msra.mxu0 0.0
    %1797 = vmatprep.subr.mxu0 0.0
    %1798 = vmatpush1.msra.mxu0 0.0
    %1799 = vmatprep.subr.mxu0 0.0
    %1800 = vmatpush1.msra.mxu0 0.0
    %1801 = vmatprep.subr.mxu0 0.0
    %1802 = vmatpush1.msra.mxu0 0.0
    %1803 = vmatprep.subr.mxu0 0.0
    %1804 = vmatpush1.msra.mxu0 0.0
    %1805 = vmatprep.subr.mxu0 0.0
    %1806 = vmatpush1.msra.mxu0 0.0
    %1807 = vmatprep.subr.mxu0 0.0
    %1808 = vmatpush1.msra.mxu0 0.0
    %1809 = vmatprep.subr.mxu0 0.0
    %1810 = vmatpush1.msra.mxu0 0.0
    %1811 = vmatprep.subr.mxu0 0.0
    %1812 = vmatpush1.msra.mxu0 0.0
    %1813 = vmatprep.subr.mxu0 0.0
    %1814 = vmatpush1.msra.mxu0 0.0
    %1815 = vmatprep.subr.mxu0 0.0
    %1816 = vmatpush1.msra.mxu0 0.0
    %1817 = vmatprep.subr.mxu0 0.0
    %1818 = vmatpush1.msra.mxu0 0.0
    %1819 = vmatprep.subr.mxu0 0.0
    %1820 = vmatpush1.msra.mxu0 0.0
    %1821 = vmatprep.subr.mxu0 0.0
    %1822 = vmatpush1.msra.mxu0 0.0
    %1823 = vmatprep.mubr.f32.mxu0 0.0
    %v1824 = vand.u32 %v1579, 4294901760
    %v1825 = vsub.f32 %v1579, %v1824
    %1826 = vmatmul.mubr.f32.gmra.mrb[0].mxu0 %v1825
    %v1827 = vpop.f32.mrb[0].mxu0
    %v1828 = vadd.f32 %v1748, %v1827
    %v1829 = vpop.f32.mrb[0].mxu0
    %1830 = vdwg.mxu0
    %1831 = vmatprep.subr.mxu0 0.0
    %v1832 = vand.u32 %v1563, 4294901760
    %1833 = vmatpush1.msra.mxu0 %v1832
    %1834 = vmatprep.subr.mxu0 0.0
    %v1835 = vand.u32 %v1564, 4294901760
    %1836 = vmatpush1.msra.mxu0 %v1835
    %1837 = vmatprep.subr.mxu0 0.0
    %v1838 = vand.u32 %v1565, 4294901760
    %1839 = vmatpush1.msra.mxu0 %v1838
    %1840 = vmatprep.subr.mxu0 0.0
    %v1841 = vand.u32 %v1566, 4294901760
    %1842 = vmatpush1.msra.mxu0 %v1841
    %1843 = vmatprep.subr.mxu0 0.0
    %1844 = vmatpush1.msra.mxu0 0.0
    %1845 = vmatprep.subr.mxu0 0.0
    %1846 = vmatpush1.msra.mxu0 0.0
    %1847 = vmatprep.subr.mxu0 0.0
    %1848 = vmatpush1.msra.mxu0 0.0
    %1849 = vmatprep.subr.mxu0 0.0
    %1850 = vmatpush1.msra.mxu0 0.0
    %1851 = vmatprep.subr.mxu0 0.0
    %1852 = vmatpush1.msra.mxu0 0.0
    %1853 = vmatprep.subr.mxu0 0.0
    %1854 = vmatpush1.msra.mxu0 0.0
    %1855 = vmatprep.subr.mxu0 0.0
    %1856 = vmatpush1.msra.mxu0 0.0
    %1857 = vmatprep.subr.mxu0 0.0
    %1858 = vmatpush1.msra.mxu0 0.0
    %1859 = vmatprep.subr.mxu0 0.0
    %1860 = vmatpush1.msra.mxu0 0.0
    %1861 = vmatprep.subr.mxu0 0.0
    %1862 = vmatpush1.msra.mxu0 0.0
    %1863 = vmatprep.subr.mxu0 0.0
    %1864 = vmatpush1.msra.mxu0 0.0
    %1865 = vmatprep.subr.mxu0 0.0
    %1866 = vmatpush1.msra.mxu0 0.0
    %1867 = vmatprep.subr.mxu0 0.0
    %1868 = vmatpush1.msra.mxu0 0.0
    %1869 = vmatprep.subr.mxu0 0.0
    %1870 = vmatpush1.msra.mxu0 0.0
    %1871 = vmatprep.subr.mxu0 0.0
    %1872 = vmatpush1.msra.mxu0 0.0
    %1873 = vmatprep.subr.mxu0 0.0
    %1874 = vmatpush1.msra.mxu0 0.0
    %1875 = vmatprep.subr.mxu0 0.0
    %1876 = vmatpush1.msra.mxu0 0.0
    %1877 = vmatprep.subr.mxu0 0.0
    %1878 = vmatpush1.msra.mxu0 0.0
    %1879 = vmatprep.subr.mxu0 0.0
    %1880 = vmatpush1.msra.mxu0 0.0
    %1881 = vmatprep.subr.mxu0 0.0
    %1882 = vmatpush1.msra.mxu0 0.0
    %1883 = vmatprep.subr.mxu0 0.0
    %1884 = vmatpush1.msra.mxu0 0.0
    %1885 = vmatprep.subr.mxu0 0.0
    %1886 = vmatpush1.msra.mxu0 0.0
    %1887 = vmatprep.subr.mxu0 0.0
    %1888 = vmatpush1.msra.mxu0 0.0
    %1889 = vmatprep.subr.mxu0 0.0
    %1890 = vmatpush1.msra.mxu0 0.0
    %1891 = vmatprep.subr.mxu0 0.0
    %1892 = vmatpush1.msra.mxu0 0.0
    %1893 = vmatprep.subr.mxu0 0.0
    %1894 = vmatpush1.msra.mxu0 0.0
    %1895 = vmatprep.subr.mxu0 0.0
    %1896 = vmatpush1.msra.mxu0 0.0
    %1897 = vmatprep.subr.mxu0 0.0
    %1898 = vmatpush1.msra.mxu0 0.0
    %1899 = vmatprep.mubr.f32.mxu0 0.0
    %v1900 = vand.u32 %v1579, 4294901760
    %v1901 = vsub.f32 %v1579, %v1900
    %v1902 = vand.u32 %v1901, 4294901760
    %1903 = vmatmul.mubr.f32.gmra.mrb[0].mxu0 %v1902
    %v1904 = vpop.f32.mrb[0].mxu0
    %v1905 = vadd.f32 %v1828, %v1904
    %v1906 = vpop.f32.mrb[0].mxu0
    %1907 = vdwg.mxu0
    %1908 = vmatprep.subr.mxu0 0.0
    %v1909 = vand.u32 %v1563, 4294901760
    %v1910 = vsub.f32 %v1563, %v1909
    %v1911 = vand.u32 %v1910, 4294901760
    %1912 = vmatpush1.msra.mxu0 %v1911
    %1913 = vmatprep.subr.mxu0 0.0
    %v1914 = vand.u32 %v1564, 4294901760
    %v1915 = vsub.f32 %v1564, %v1914
    %v1916 = vand.u32 %v1915, 4294901760
    %1917 = vmatpush1.msra.mxu0 %v1916
    %1918 = vmatprep.subr.mxu0 0.0
    %v1919 = vand.u32 %v1565, 4294901760
    %v1920 = vsub.f32 %v1565, %v1919
    %v1921 = vand.u32 %v1920, 4294901760
    %1922 = vmatpush1.msra.mxu0 %v1921
    %1923 = vmatprep.subr.mxu0 0.0
    %v1924 = vand.u32 %v1566, 4294901760
    %v1925 = vsub.f32 %v1566, %v1924
    %v1926 = vand.u32 %v1925, 4294901760
    %1927 = vmatpush1.msra.mxu0 %v1926
    %1928 = vmatprep.subr.mxu0 0.0
    %1929 = vmatpush1.msra.mxu0 0.0
    %1930 = vmatprep.subr.mxu0 0.0
    %1931 = vmatpush1.msra.mxu0 0.0
    %1932 = vmatprep.subr.mxu0 0.0
    %1933 = vmatpush1.msra.mxu0 0.0
    %1934 = vmatprep.subr.mxu0 0.0
    %1935 = vmatpush1.msra.mxu0 0.0
    %1936 = vmatprep.subr.mxu0 0.0
    %1937 = vmatpush1.msra.mxu0 0.0
    %1938 = vmatprep.subr.mxu0 0.0
    %1939 = vmatpush1.msra.mxu0 0.0
    %1940 = vmatprep.subr.mxu0 0.0
    %1941 = vmatpush1.msra.mxu0 0.0
    %1942 = vmatprep.subr.mxu0 0.0
    %1943 = vmatpush1.msra.mxu0 0.0
    %1944 = vmatprep.subr.mxu0 0.0
    %1945 = vmatpush1.msra.mxu0 0.0
    %1946 = vmatprep.subr.mxu0 0.0
    %1947 = vmatpush1.msra.mxu0 0.0
    %1948 = vmatprep.subr.mxu0 0.0
    %1949 = vmatpush1.msra.mxu0 0.0
    %1950 = vmatprep.subr.mxu0 0.0
    %1951 = vmatpush1.msra.mxu0 0.0
    %1952 = vmatprep.subr.mxu0 0.0
    %1953 = vmatpush1.msra.mxu0 0.0
    %1954 = vmatprep.subr.mxu0 0.0
    %1955 = vmatpush1.msra.mxu0 0.0
    %1956 = vmatprep.subr.mxu0 0.0
    %1957 = vmatpush1.msra.mxu0 0.0
    %1958 = vmatprep.subr.mxu0 0.0
    %1959 = vmatpush1.msra.mxu0 0.0
    %1960 = vmatprep.subr.mxu0 0.0
    %1961 = vmatpush1.msra.mxu0 0.0
    %1962 = vmatprep.subr.mxu0 0.0
    %1963 = vmatpush1.msra.mxu0 0.0
    %1964 = vmatprep.subr.mxu0 0.0
    %1965 = vmatpush1.msra.mxu0 0.0
    %1966 = vmatprep.subr.mxu0 0.0
    %1967 = vmatpush1.msra.mxu0 0.0
    %1968 = vmatprep.subr.mxu0 0.0
    %1969 = vmatpush1.msra.mxu0 0.0
    %1970 = vmatprep.subr.mxu0 0.0
    %1971 = vmatpush1.msra.mxu0 0.0
    %1972 = vmatprep.subr.mxu0 0.0
    %1973 = vmatpush1.msra.mxu0 0.0
    %1974 = vmatprep.subr.mxu0 0.0
    %1975 = vmatpush1.msra.mxu0 0.0
    %1976 = vmatprep.subr.mxu0 0.0
    %1977 = vmatpush1.msra.mxu0 0.0
    %1978 = vmatprep.subr.mxu0 0.0
    %1979 = vmatpush1.msra.mxu0 0.0
    %1980 = vmatprep.subr.mxu0 0.0
    %1981 = vmatpush1.msra.mxu0 0.0
    %1982 = vmatprep.subr.mxu0 0.0
    %1983 = vmatpush1.msra.mxu0 0.0
    %1984 = vmatprep.mubr.f32.mxu0 0.0
    %v1985 = vand.u32 %v1579, 4294901760
    %1986 = vmatmul.mubr.f32.gmra.mrb[0].mxu0 %v1985
    %v1987 = vpop.f32.mrb[0].mxu0
    %v1988 = vadd.f32 %v1905, %v1987
    %v1989 = vpop.f32.mrb[0].mxu0
    %1990 = vdwg.mxu0
    %1991 = vmatprep.subr.mxu0 0.0
    %v1992 = vand.u32 %v1563, 4294901760
    %1993 = vmatpush1.msra.mxu0 %v1992
    %1994 = vmatprep.subr.mxu0 0.0
    %v1995 = vand.u32 %v1564, 4294901760
    %1996 = vmatpush1.msra.mxu0 %v1995
    %1997 = vmatprep.subr.mxu0 0.0
    %v1998 = vand.u32 %v1565, 4294901760
    %1999 = vmatpush1.msra.mxu0 %v1998
    %2000 = vmatprep.subr.mxu0 0.0
    %v2001 = vand.u32 %v1566, 4294901760
    %2002 = vmatpush1.msra.mxu0 %v2001
    %2003 = vmatprep.subr.mxu0 0.0
    %2004 = vmatpush1.msra.mxu0 0.0
    %2005 = vmatprep.subr.mxu0 0.0
    %2006 = vmatpush1.msra.mxu0 0.0
    %2007 = vmatprep.subr.mxu0 0.0
    %2008 = vmatpush1.msra.mxu0 0.0
    %2009 = vmatprep.subr.mxu0 0.0
    %2010 = vmatpush1.msra.mxu0 0.0
    %2011 = vmatprep.subr.mxu0 0.0
    %2012 = vmatpush1.msra.mxu0 0.0
    %2013 = vmatprep.subr.mxu0 0.0
    %2014 = vmatpush1.msra.mxu0 0.0
    %2015 = vmatprep.subr.mxu0 0.0
    %2016 = vmatpush1.msra.mxu0 0.0
    %2017 = vmatprep.subr.mxu0 0.0
    %2018 = vmatpush1.msra.mxu0 0.0
    %2019 = vmatprep.subr.mxu0 0.0
    %2020 = vmatpush1.msra.mxu0 0.0
    %2021 = vmatprep.subr.mxu0 0.0
    %2022 = vmatpush1.msra.mxu0 0.0
    %2023 = vmatprep.subr.mxu0 0.0
    %2024 = vmatpush1.msra.mxu0 0.0
    %2025 = vmatprep.subr.mxu0 0.0
    %2026 = vmatpush1.msra.mxu0 0.0
    %2027 = vmatprep.subr.mxu0 0.0
    %2028 = vmatpush1.msra.mxu0 0.0
    %2029 = vmatprep.subr.mxu0 0.0
    %2030 = vmatpush1.msra.mxu0 0.0
    %2031 = vmatprep.subr.mxu0 0.0
    %2032 = vmatpush1.msra.mxu0 0.0
    %2033 = vmatprep.subr.mxu0 0.0
    %2034 = vmatpush1.msra.mxu0 0.0
    %2035 = vmatprep.subr.mxu0 0.0
    %2036 = vmatpush1.msra.mxu0 0.0
    %2037 = vmatprep.subr.mxu0 0.0
    %2038 = vmatpush1.msra.mxu0 0.0
    %2039 = vmatprep.subr.mxu0 0.0
    %2040 = vmatpush1.msra.mxu0 0.0
    %2041 = vmatprep.subr.mxu0 0.0
    %2042 = vmatpush1.msra.mxu0 0.0
    %2043 = vmatprep.subr.mxu0 0.0
    %2044 = vmatpush1.msra.mxu0 0.0
    %2045 = vmatprep.subr.mxu0 0.0
    %2046 = vmatpush1.msra.mxu0 0.0
    %2047 = vmatprep.subr.mxu0 0.0
    %2048 = vmatpush1.msra.mxu0 0.0
    %2049 = vmatprep.subr.mxu0 0.0
    %2050 = vmatpush1.msra.mxu0 0.0
    %2051 = vmatprep.subr.mxu0 0.0
    %2052 = vmatpush1.msra.mxu0 0.0
    %2053 = vmatprep.subr.mxu0 0.0
    %2054 = vmatpush1.msra.mxu0 0.0
    %2055 = vmatprep.subr.mxu0 0.0
    %2056 = vmatpush1.msra.mxu0 0.0
    %2057 = vmatprep.subr.mxu0 0.0
    %2058 = vmatpush1.msra.mxu0 0.0
    %2059 = vmatprep.mubr.f32.mxu0 0.0
    %v2060 = vand.u32 %v1579, 4294901760
    %2061 = vmatmul.mubr.f32.gmra.mrb[0].mxu0 %v2060
    %v2062 = vpop.f32.mrb[0].mxu0
    %v2063 = vadd.f32 %v1988, %v2062
    %v2064 = vpop.f32.mrb[0].mxu0
    %2065 = vdwg.mxu0
    %v2066 = vmul.f32 %v2063, 0.5
    %v2067 = vtanh.pop %v2066
    %v2068 = vadd.f32 %v2067, 1.0
    %v2069 = vmul.f32 %v2068, 0.5
    %2070 = vst [vmem:[#allocation3] sm:$0x1] %v2069
    // Predicated region
    $region30: #{tpu_custom_call.1} parent=1 // pred_check
      _
    $region31: #{tpu_custom_call.1} parent=1 // pred_check_branch
      %2072 = sbr.rel (0) target = $region33
    $region32: #{tpu_custom_call.1} parent=1 // pred_region
      %s2074 = ssub.s32 16, 16
      %2075 = vsyncadd [#allocation4], %s2074
      %s2077 = sshll.u32 [#allocation3], 4
      %s2078 = int_to_ptr.vmem [resolvable:$true] %s2077
      %2080 = dma.vmem_to_hbm [thread:$0]  %s2078, 16, %s7, [#allocation4]
    $region33: #{tpu_custom_call.1} parent=1 // pred_fallthru
      _
    // Predicated region
    $region34: #{tpu_custom_call.1} parent=1 // pred_check
      _
    $region35: #{tpu_custom_call.1} parent=1 // pred_check_branch
      %2082 = sbr.rel (0) target = $region37
    $region36: #{tpu_custom_call.1} parent=1 // pred_region
      %2083 = dma.done [#allocation4], 16
    $region37: #{tpu_custom_call.1} parent=1 // pred_fallthru
      _
    %2084 = vsyncpa [#allocation4], 1

</llo_original>
